<compile_context>
chip_gen: v6e
topology: v6e:2x2x1
jax: 0.10.0
libtpu: 0.0.40
codegen_flags: <defaults>
</compile_context>

<pallas_src>
import functools

import jax
import jax.numpy as jnp
from jax.experimental import pallas as pl
from jax.experimental.pallas import tpu as pltpu


_INV_SQRT2 = 0.7071067811865476


def _erf(x):
    # Abramowitz & Stegun 7.1.26 rational approximation of erf, |err| < 1.5e-7
    # (the approx reciprocal below relaxes this to ~1e-4 relative; fine for
    # bf16 activations and the 2e-2 test tolerance).
    a1, a2, a3, a4, a5 = (0.254829592, -0.284496736, 1.421413741,
                          -1.453152027, 1.061405429)
    p = 0.3275911
    sgn = jnp.where(x >= 0.0, 1.0, -1.0)
    ax = jnp.abs(x)
    # EUP approx reciprocal: moves the divide off the VALU onto the (otherwise
    # idle except for exp) EUP slot.
    t = pl.reciprocal(1.0 + p * ax, approx=True)
    poly = ((((a5 * t + a4) * t + a3) * t + a2) * t + a1) * t
    return sgn * (1.0 - poly * jnp.exp(-ax * ax))


def _gelu_exact(x):
    # erf-form GELU (matches PyTorch's default nn.GELU, not the tanh approx).
    return 0.5 * x * (1.0 + _erf(x * _INV_SQRT2))


# ----------------------- grouped expert MLP kernel ---------------------------

def _grouped_expert_kernel(block_expert_ref, nreal_ref, x_ref, w1_ref, b1_ref,
                           w2_ref, b2_ref, out_ref, acc_ref, *, gelu_bf16):
    # block_expert_ref (SMEM scalar prefetch) is consumed only by the index_maps.
    del block_expert_ref
    g = pl.program_id(0)
    k = pl.program_id(1)
    nk = pl.num_programs(1)
    is_real = g < nreal_ref[0]
    last_k = k == nk - 1

    @pl.when(jnp.logical_and(is_real, k == 0))
    def _():
        acc_ref[...] = jnp.zeros_like(acc_ref)

    @pl.when(is_real)
    def _():
        x = x_ref[...]                                              # (bm, d) bf16
        h = jnp.dot(x, w1_ref[...],
                    preferred_element_type=jnp.float32) + b1_ref[...]
        if gelu_bf16:
            # v6e/v7x: bf16 VPU/EUP -> half the VALU element ops + VMEM traffic.
            hb = _gelu_exact(h.astype(jnp.bfloat16))
        else:
            hb = _gelu_exact(h).astype(jnp.bfloat16)
        acc_ref[...] += jnp.dot(hb, w2_ref[...],
                                preferred_element_type=jnp.float32)

    @pl.when(jnp.logical_and(last_k, is_real))
    def _():
        out_ref[...] = (acc_ref[...] + b2_ref[...]).astype(out_ref.dtype)

    @pl.when(jnp.logical_and(last_k, jnp.logical_not(is_real)))
    def _():
        # Dummy/padding blocks past the last real group: no MXU work, just
        # write zeros so y_disp is well-defined (rows are never gathered back).
        out_ref[...] = jnp.zeros_like(out_ref)


def grouped_expert_mlp(x_disp, block_expert, num_real_blocks,
                       w1_t, b1, w2_t, b2, *, block_m, k_tile, gelu_bf16):
    pad_rows, d_model = x_disp.shape
    num_experts, _, d_hidden = w1_t.shape
    g_max = pad_rows // block_m

    tk = min(k_tile, d_hidden)
    if d_hidden % tk != 0:
        tk = d_hidden                      # fall back to a single K chunk
    n_k = d_hidden // tk

    kernel = functools.partial(_grouped_expert_kernel, gelu_bf16=gelu_bf16)

    # Advisory cost estimate: two matmuls per row, weights streamed roughly
    # once per expert, one exp per hidden element.
    flops = 4 * pad_rows * d_model * d_hidden
    transcendentals = pad_rows * d_hidden
    bytes_accessed = (
        num_experts * 2 * d_model * d_hidden * w1_t.dtype.itemsize   # weights
        + pad_rows * d_model * x_disp.dtype.itemsize                 # x_disp in
        + pad_rows * d_model * 2)                                    # bf16 y out

    return pl.pallas_call(
        kernel,
        out_shape=jax.ShapeDtypeStruct((pad_rows, d_model), jnp.bfloat16),
        grid_spec=pltpu.PrefetchScalarGridSpec(
            num_scalar_prefetch=2,
            grid=(g_max, n_k),
            in_specs=[
                # dispatched activations: block g -> rows [g*bm, (g+1)*bm),
                # resident across the K axis.
                pl.BlockSpec((block_m, d_model), lambda g, k, be, nr: (g, 0)),
                # per-expert, K-tiled weights/biases selected via prefetch table
                pl.BlockSpec((pl.Squeezed(), d_model, tk),
                             lambda g, k, be, nr: (be[g], 0, k)),
                pl.BlockSpec((pl.Squeezed(), 1, tk),
                             lambda g, k, be, nr: (be[g], 0, k)),
                pl.BlockSpec((pl.Squeezed(), tk, d_model),
                             lambda g, k, be, nr: (be[g], k, 0)),
                pl.BlockSpec((pl.Squeezed(), 1, d_model),
                             lambda g, k, be, nr: (be[g], 0, 0)),
            ],
            out_specs=pl.BlockSpec((block_m, d_model),
                                   lambda g, k, be, nr: (g, 0)),
            scratch_shapes=[pltpu.VMEM((block_m, d_model), jnp.float32)],
        ),
        compiler_params=pltpu.CompilerParams(
            # row blocks independent -> megacore-parallel; K reduction last.
            dimension_semantics=("parallel", "arbitrary"),
            vmem_limit_bytes=56 * 1024 * 1024),
        cost_estimate=pl.CostEstimate(
            flops=flops, transcendentals=transcendentals,
            bytes_accessed=bytes_accessed),
    )(block_expert, num_real_blocks, x_disp, w1_t, b1, w2_t, b2)


# ------------------------------ pMoE forward ---------------------------------

@functools.partial(jax.jit,
                   static_argnames=("top_k", "block_m", "k_tile", "gelu_bf16"))
def pmoe_forward(moe_inp, params, top_k, block_m=128, k_tile=1024,
                 gelu_bf16=False):
    num_experts = params["w1_t"].shape[0]
    bsz, d_model = moe_inp.shape

    # ---- NaiveGate (plain XLA) ----
    logits = moe_inp @ params["w_gate_t"] + params["b_gate"]
    top_val, gate_top_k_idx = jax.lax.top_k(logits, top_k)
    # NOTE: pMoE computes gate_score (softmax of top-k logits) and returns it,
    # but the combine in _pmoe_general_global_forward is an UNWEIGHTED sum over
    # the top_k expert outputs (reshaped_tensor.sum(dim=1)). Do not "fix" this.
    gate_score = jax.nn.softmax(top_val, axis=-1)
    del gate_score
    gate_top_k_idx = gate_top_k_idx.astype(jnp.int32)

    # ---- dispatch: sort (token, k) pairs by expert, pad groups to block_m ----
    s = bsz * top_k
    g_max = pl.cdiv(s, block_m) + num_experts          # static bound on #blocks
    pad_rows = g_max * block_m

    flat_e = gate_top_k_idx.reshape(-1)                                   # (S,)
    order = jnp.argsort(flat_e)                                           # (S,)
    sorted_e = flat_e[order]
    counts = jnp.bincount(flat_e, length=num_experts).astype(jnp.int32)   # (E,)
    padded_counts = (counts + block_m - 1) // block_m * block_m
    grp_start = jnp.concatenate(
        [jnp.zeros((1,), jnp.int32), jnp.cumsum(counts)[:-1].astype(jnp.int32)])
    grp_pad_start = jnp.concatenate(
        [jnp.zeros((1,), jnp.int32),
         jnp.cumsum(padded_counts)[:-1].astype(jnp.int32)])
    j = jnp.arange(s, dtype=jnp.int32)
    dest_row = grp_pad_start[sorted_e] + (j - grp_start[sorted_e])        # (S,)
    src_token = order // top_k                                            # (S,)

    x_bf16 = moe_inp.astype(jnp.bfloat16)
    x_disp = jnp.zeros((pad_rows, d_model), jnp.bfloat16
                       ).at[dest_row].set(x_bf16[src_token])
    # TODO(synk): if the scatter/gather around the kernel shows up in profiles,
    # keep x in HBM (memory_space=pl.ANY) and gather rows inside the kernel via
    # a prefetched per-block row-index table + manual make_async_copy.

    # per-block expert id + number of real (non-padding) blocks, both
    # scalar-prefetched into SMEM.
    cum_nb = jnp.cumsum(padded_counts // block_m).astype(jnp.int32)
    g = jnp.arange(g_max, dtype=jnp.int32)
    block_expert = jnp.minimum(
        jnp.searchsorted(cum_nb, g, side="right"), num_experts - 1
    ).astype(jnp.int32)
    num_real_blocks = cum_nb[-1:]                                   # shape (1,)

    # ---- expert computation (Pallas kernel) ----
    y_disp = grouped_expert_mlp(
        x_disp, block_expert, num_real_blocks,
        params["w1_t"], params["b1"], params["w2_t"], params["b2"],
        block_m=block_m, k_tile=k_tile, gelu_bf16=gelu_bf16)

    # ---- combine: gather back to (token, k) order, unweighted f32 sum over top_k
    dest_for_flat = jnp.zeros((s,), jnp.int32).at[order].set(dest_row)
    gathered = y_disp[dest_for_flat].astype(jnp.float32)
    moe_outp = gathered.reshape(bsz, top_k, d_model).sum(axis=1)
    return moe_outp.astype(moe_inp.dtype), gate_top_k_idx


# ------------------------------- reference -----------------------------------

def pmoe_reference(moe_inp, params, top_k):
    logits = moe_inp @ params["w_gate_t"] + params["b_gate"]
    _, idx = jax.lax.top_k(logits, top_k)
    # mirror the kernel's bf16-operand / f32-accumulate / bf16-output numerics
    xb = moe_inp.astype(jnp.bfloat16).astype(jnp.float32)
    out = jnp.zeros_like(moe_inp)
    num_experts = params["w1_t"].shape[0]
    for e in range(num_experts):
        w1 = params["w1_t"][e].astype(jnp.float32)
        w2 = params["w2_t"][e].astype(jnp.float32)
        h = jax.nn.gelu(xb @ w1 + params["b1"][e, 0], approximate=False)
        y = h.astype(jnp.bfloat16).astype(jnp.float32) @ w2 + params["b2"][e, 0]
        y = y.astype(jnp.bfloat16).astype(jnp.float32)
        m = jnp.any(idx == e, axis=-1, keepdims=True)
        out = out + jnp.where(m, y, 0.0)
    return out, idx


# ---------------------------------- main --------------------------------------

if __name__ == "__main__":
    # small synthetic config (module defaults: total_experts=32, d_model=1024, top_k=2)
    num_tokens = 256
    d_model = 128
    d_hidden = 256
    total_experts = 4      # world_size = 1 -> num_expert = 4
    top_k = 2
    block_m = 128
    k_tile = 128           # exercises the K-tiled accumulation path (n_k = 2)

    key = jax.random.PRNGKey(0)
    ks = jax.random.split(key, 8)
    moe_inp = jax.random.normal(ks[0], (num_tokens, d_model), jnp.float32)

    s_g = 1.0 / jnp.sqrt(d_model)
    s_1 = 1.0 / jnp.sqrt(d_model)
    s_2 = 1.0 / jnp.sqrt(d_hidden)
    params = {
        # NaiveGate linear (stored transposed): Wg^T [d, E], bg [E]
        "w_gate_t": jax.random.normal(ks[1], (d_model, total_experts), jnp.float32) * s_g,
        "b_gate": jax.random.normal(ks[2], (total_experts,), jnp.float32) * s_g,
        # fused experts (FMoELinear pair), stored transposed; bf16 for the MXU
        "w1_t": (jax.random.normal(ks[3], (total_experts, d_model, d_hidden),
                                   jnp.float32) * s_1).astype(jnp.bfloat16),
        "b1": jax.random.normal(ks[4], (total_experts, 1, d_hidden), jnp.float32) * s_1,
        "w2_t": (jax.random.normal(ks[5], (total_experts, d_hidden, d_model),
                                   jnp.float32) * s_2).astype(jnp.bfloat16),
        "b2": jax.random.normal(ks[6], (total_experts, 1, d_model), jnp.float32) * s_2,
    }

    out, idx = pmoe_forward(moe_inp, params, top_k,
                            block_m=block_m, k_tile=k_tile, gelu_bf16=False)
    jax.block_until_ready(out)

    ref_out, ref_idx = pmoe_reference(moe_inp, params, top_k)
    assert out.shape == (num_tokens, d_model)
    assert idx.shape == (num_tokens, top_k)
    assert jnp.array_equal(idx, ref_idx), "top-k expert indices mismatch"
    assert jnp.allclose(out, ref_out, atol=2e-2, rtol=2e-2), (
        float(jnp.max(jnp.abs(out - ref_out))))

    print("KERNEL_OK")
</pallas_src>

<mosaic_0001>
module attributes {stable_mosaic.version = 11 : i64} {
  func.func private @main(%arg0: i32) attributes {dimension_semantics = [#tpu.dimension_semantics<core_parallel>], iteration_bounds = array<i64: 2>, tpu.core_type = #tpu.core_type<sc_scalar_subcore>, window_params = []} {
    return
  }
}

module attributes {stable_mosaic.version = 11 : i64} {
  func.func private @main(%arg0: i32) attributes {dimension_semantics = [#tpu.dimension_semantics<core_parallel>], iteration_bounds = array<i64: 2>, tpu.core_type = #tpu.core_type<sc_scalar_subcore>, window_params = []} {
    return
  }
}

module attributes {stable_mosaic.version = 11 : i64} {
  func.func @_grouped_expert_kernel(%arg0: i32, %arg1: i32, %arg2: memref<8xi32, #tpu.memory_space<smem>>, %arg3: memref<1xi32, #tpu.memory_space<smem>>, %arg4: memref<128x128xbf16, #tpu.memory_space<vmem>>, %arg5: memref<1x128x128xbf16, #tpu.memory_space<vmem>>, %arg6: memref<1x1x128xf32, #tpu.memory_space<vmem>>, %arg7: memref<1x128x128xbf16, #tpu.memory_space<vmem>>, %arg8: memref<1x1x128xf32, #tpu.memory_space<vmem>>, %arg9: memref<128x128xbf16, #tpu.memory_space<vmem>>, %arg10: memref<128x128xf32, #tpu.memory_space<vmem>>) attributes {dimension_semantics = [#tpu.dimension_semantics<parallel>, #tpu.dimension_semantics<arbitrary>], iteration_bounds = array<i64: 8, 2>, scalar_prefetch = 2 : i64, scratch_operands = 1 : i64, tpu.core_type = #tpu.core_type<tc>, window_params = [{transform_indices = @transform_0, window_bounds = array<i64: 128, 128>}, {transform_indices = @transform_1, window_bounds = array<i64: 1, 128, 128>}, {transform_indices = @transform_2, window_bounds = array<i64: 1, 1, 128>}, {transform_indices = @transform_3, window_bounds = array<i64: 1, 128, 128>}, {transform_indices = @transform_4, window_bounds = array<i64: 1, 1, 128>}, {transform_indices = @transform_5, window_bounds = array<i64: 128, 128>}]} {
    %c0 = arith.constant 0 : index
    %0 = memref.load %arg3[%c0] : memref<1xi32, #tpu.memory_space<smem>>
    %1 = arith.cmpi slt, %arg0, %0 : i32
    %c1_i32 = arith.constant 1 : i32
    %2 = arith.cmpi eq, %arg1, %c1_i32 : i32
    %c0_i32 = arith.constant 0 : i32
    %3 = arith.cmpi eq, %arg1, %c0_i32 : i32
    %4 = arith.andi %1, %3 : i1
    %5 = arith.extui %4 : i1 to i32
    %c0_i32_0 = arith.constant 0 : i32
    %6 = arith.cmpi ne, %5, %c0_i32_0 : i32
    scf.if %6 {
      %cst = arith.constant 0.000000e+00 : f32
      %16 = vector.broadcast %cst : f32 to vector<128x128xf32>
      %c0_4 = arith.constant 0 : index
      %c0_5 = arith.constant 0 : index
      %17 = vector.load %arg10[%c0_4, %c0_5] : memref<128x128xf32, #tpu.memory_space<vmem>>, vector<128x128xf32>
      tpu.vector_store %arg10[%c0_4, %c0_5], %16 {strides = array<i32>} : memref<128x128xf32, #tpu.memory_space<vmem>>, vector<128x128xf32>,
    } else {
    }
    %7 = arith.extui %1 : i1 to i32
    %c0_i32_1 = arith.constant 0 : i32
    %8 = arith.cmpi ne, %7, %c0_i32_1 : i32
    scf.if %8 {
      %c0_4 = arith.constant 0 : index
      %c0_5 = arith.constant 0 : index
      %16 = vector.load %arg4[%c0_4, %c0_5] : memref<128x128xbf16, #tpu.memory_space<vmem>>, vector<128x128xbf16>
      %c0_6 = arith.constant 0 : index
      %c0_7 = arith.constant 0 : index
      %c0_8 = arith.constant 0 : index
      %17 = vector.load %arg5[%c0_6, %c0_7, %c0_8] : memref<1x128x128xbf16, #tpu.memory_space<vmem>>, vector<1x128x128xbf16>
      %18 = vector.shape_cast %17 : vector<1x128x128xbf16> to vector<128x128xbf16>
      %cst = arith.constant dense<0.000000e+00> : vector<128x128xf32>
      %19 = tpu.matmul %16, %18, %cst {dimension_numbers = #tpu.dot_dimension_numbers<[1], [0], [0], [1], [0, 0, 1, 1], [], []>} : vector<128x128xbf16>, vector<128x128xbf16>, vector<128x128xf32> -> vector<128x128xf32>
      %c0_9 = arith.constant 0 : index
      %c0_10 = arith.constant 0 : index
      %c0_11 = arith.constant 0 : index
      %20 = vector.load %arg6[%c0_9, %c0_10, %c0_11] : memref<1x1x128xf32, #tpu.memory_space<vmem>>, vector<1x1x128xf32>
      %21 = vector.shape_cast %20 : vector<1x1x128xf32> to vector<1x128xf32>
      %22 = vector.broadcast %21 : vector<1x128xf32> to vector<128x128xf32>
      %23 = arith.addf %19, %22 : vector<128x128xf32>
      %cst_12 = arith.constant 5.000000e-01 : f32
      %24 = vector.broadcast %cst_12 : f32 to vector<128x128xf32>
      %25 = arith.mulf %24, %23 : vector<128x128xf32>
      %cst_13 = arith.constant 0.707106769 : f32
      %26 = vector.broadcast %cst_13 : f32 to vector<128x128xf32>
      %27 = arith.mulf %23, %26 : vector<128x128xf32>
      %cst_14 = arith.constant 0.000000e+00 : f32
      %28 = vector.broadcast %cst_14 : f32 to vector<128x128xf32>
      %29 = arith.cmpf oge, %27, %28 : vector<128x128xf32>
      %cst_15 = arith.constant 1.000000e+00 : f32
      %cst_16 = arith.constant -1.000000e+00 : f32
      %30 = vector.broadcast %cst_15 : f32 to vector<128x128xf32>
      %31 = vector.broadcast %cst_16 : f32 to vector<128x128xf32>
      %32 = arith.select %29, %30, %31 : vector<128x128xi1>, vector<128x128xf32>
      %33 = math.absf %27 : vector<128x128xf32>
      %cst_17 = arith.constant 0.327591091 : f32
      %34 = vector.broadcast %cst_17 : f32 to vector<128x128xf32>
      %35 = arith.mulf %34, %33 : vector<128x128xf32>
      %cst_18 = arith.constant 1.000000e+00 : f32
      %36 = vector.broadcast %cst_18 : f32 to vector<128x128xf32>
      %37 = arith.addf %36, %35 : vector<128x128xf32>
      %38 = tpu.reciprocal %37 {approx = true} : vector<128x128xf32> -> vector<128x128xf32>
      %cst_19 = arith.constant 1.06140542 : f32
      %39 = vector.broadcast %cst_19 : f32 to vector<128x128xf32>
      %40 = arith.mulf %39, %38 : vector<128x128xf32>
      %cst_20 = arith.constant -1.45315206 : f32
      %41 = vector.broadcast %cst_20 : f32 to vector<128x128xf32>
      %42 = arith.addf %40, %41 : vector<128x128xf32>
      %43 = arith.mulf %42, %38 : vector<128x128xf32>
      %cst_21 = arith.constant 1.42141378 : f32
      %44 = vector.broadcast %cst_21 : f32 to vector<128x128xf32>
      %45 = arith.addf %43, %44 : vector<128x128xf32>
      %46 = arith.mulf %45, %38 : vector<128x128xf32>
      %cst_22 = arith.constant -0.284496725 : f32
      %47 = vector.broadcast %cst_22 : f32 to vector<128x128xf32>
      %48 = arith.addf %46, %47 : vector<128x128xf32>
      %49 = arith.mulf %48, %38 : vector<128x128xf32>
      %cst_23 = arith.constant 0.254829586 : f32
      %50 = vector.broadcast %cst_23 : f32 to vector<128x128xf32>
      %51 = arith.addf %49, %50 : vector<128x128xf32>
      %52 = arith.mulf %51, %38 : vector<128x128xf32>
      %cst_24 = arith.constant 0.000000e+00 : f32
      %53 = vector.broadcast %cst_24 : f32 to vector<128x128xf32>
      %54 = arith.subf %53, %33 : vector<128x128xf32>
      %55 = arith.mulf %54, %33 : vector<128x128xf32>
      %56 = math.exp %55 : vector<128x128xf32>
      %57 = arith.mulf %52, %56 : vector<128x128xf32>
      %cst_25 = arith.constant 1.000000e+00 : f32
      %58 = vector.broadcast %cst_25 : f32 to vector<128x128xf32>
      %59 = arith.subf %58, %57 : vector<128x128xf32>
      %60 = arith.mulf %32, %59 : vector<128x128xf32>
      %cst_26 = arith.constant 1.000000e+00 : f32
      %61 = vector.broadcast %cst_26 : f32 to vector<128x128xf32>
      %62 = arith.addf %61, %60 : vector<128x128xf32>
      %63 = arith.mulf %25, %62 : vector<128x128xf32>
      %64 = arith.truncf %63 : vector<128x128xf32> to vector<128x128xbf16>
      %c0_27 = arith.constant 0 : index
      %c0_28 = arith.constant 0 : index
      %65 = vector.load %arg10[%c0_27, %c0_28] : memref<128x128xf32, #tpu.memory_space<vmem>>, vector<128x128xf32>
      %c0_29 = arith.constant 0 : index
      %c0_30 = arith.constant 0 : index
      %c0_31 = arith.constant 0 : index
      %66 = vector.load %arg7[%c0_29, %c0_30, %c0_31] : memref<1x128x128xbf16, #tpu.memory_space<vmem>>, vector<1x128x128xbf16>
      %67 = vector.shape_cast %66 : vector<1x128x128xbf16> to vector<128x128xbf16>
      %cst_32 = arith.constant dense<0.000000e+00> : vector<128x128xf32>
      %68 = tpu.matmul %64, %67, %cst_32 {dimension_numbers = #tpu.dot_dimension_numbers<[1], [0], [0], [1], [0, 0, 1, 1], [], []>} : vector<128x128xbf16>, vector<128x128xbf16>, vector<128x128xf32> -> vector<128x128xf32>
      %69 = arith.addf %65, %68 : vector<128x128xf32>
      %c0_33 = arith.constant 0 : index
      %c0_34 = arith.constant 0 : index
      %70 = vector.load %arg10[%c0_33, %c0_34] : memref<128x128xf32, #tpu.memory_space<vmem>>, vector<128x128xf32>
      tpu.vector_store %arg10[%c0_33, %c0_34], %69 {strides = array<i32>} : memref<128x128xf32, #tpu.memory_space<vmem>>, vector<128x128xf32>,
    } else {
    }
    %9 = arith.andi %2, %1 : i1
    %10 = arith.extui %9 : i1 to i32
    %c0_i32_2 = arith.constant 0 : i32
    %11 = arith.cmpi ne, %10, %c0_i32_2 : i32
    scf.if %11 {
      %c0_4 = arith.constant 0 : index
      %c0_5 = arith.constant 0 : index
      %16 = vector.load %arg10[%c0_4, %c0_5] : memref<128x128xf32, #tpu.memory_space<vmem>>, vector<128x128xf32>
      %c0_6 = arith.constant 0 : index
      %c0_7 = arith.constant 0 : index
      %c0_8 = arith.constant 0 : index
      %17 = vector.load %arg8[%c0_6, %c0_7, %c0_8] : memref<1x1x128xf32, #tpu.memory_space<vmem>>, vector<1x1x128xf32>
      %18 = vector.shape_cast %17 : vector<1x1x128xf32> to vector<1x128xf32>
      %19 = vector.broadcast %18 : vector<1x128xf32> to vector<128x128xf32>
      %20 = arith.addf %16, %19 : vector<128x128xf32>
      %21 = arith.truncf %20 : vector<128x128xf32> to vector<128x128xbf16>
      %c0_9 = arith.constant 0 : index
      %c0_10 = arith.constant 0 : index
      %22 = vector.load %arg9[%c0_9, %c0_10] : memref<128x128xbf16, #tpu.memory_space<vmem>>, vector<128x128xbf16>
      tpu.vector_store %arg9[%c0_9, %c0_10], %21 {strides = array<i32>} : memref<128x128xbf16, #tpu.memory_space<vmem>>, vector<128x128xbf16>,
    } else {
    }
    %true = arith.constant true
    %12 = arith.xori %1, %true : i1
    %13 = arith.andi %2, %12 : i1
    %14 = arith.extui %13 : i1 to i32
    %c0_i32_3 = arith.constant 0 : i32
    %15 = arith.cmpi ne, %14, %c0_i32_3 : i32
    scf.if %15 {
      %cst = arith.constant 0.000000e+00 : bf16
      %16 = vector.broadcast %cst : bf16 to vector<128x128xbf16>
      %c0_4 = arith.constant 0 : index
      %c0_5 = arith.constant 0 : index
      %17 = vector.load %arg9[%c0_4, %c0_5] : memref<128x128xbf16, #tpu.memory_space<vmem>>, vector<128x128xbf16>
      tpu.vector_store %arg9[%c0_4, %c0_5], %16 {strides = array<i32>} : memref<128x128xbf16, #tpu.memory_space<vmem>>, vector<128x128xbf16>,
    } else {
    }
    return
  }
  func.func @transform_0(%arg0: i32, %arg1: i32, %arg2: memref<8xi32, #tpu.memory_space<smem>>, %arg3: memref<1xi32, #tpu.memory_space<smem>>) -> (i32, i32) {
    %c0_i32 = arith.constant 0 : i32
    %c0_i32_0 = arith.constant 0 : i32
    return %arg0, %c0_i32 : i32, i32
  }
  func.func @transform_1(%arg0: i32, %arg1: i32, %arg2: memref<8xi32, #tpu.memory_space<smem>>, %arg3: memref<1xi32, #tpu.memory_space<smem>>) -> (i32, i32, i32) {
    %0 = arith.index_cast %arg0 : i32 to index
    %1 = memref.load %arg2[%0] : memref<8xi32, #tpu.memory_space<smem>>
    %c0_i32 = arith.constant 0 : i32
    %c0_i32_0 = arith.constant 0 : i32
    return %1, %c0_i32, %arg1 : i32, i32, i32
  }
  func.func @transform_2(%arg0: i32, %arg1: i32, %arg2: memref<8xi32, #tpu.memory_space<smem>>, %arg3: memref<1xi32, #tpu.memory_space<smem>>) -> (i32, i32, i32) {
    %0 = arith.index_cast %arg0 : i32 to index
    %1 = memref.load %arg2[%0] : memref<8xi32, #tpu.memory_space<smem>>
    %c0_i32 = arith.constant 0 : i32
    %c0_i32_0 = arith.constant 0 : i32
    return %1, %c0_i32, %arg1 : i32, i32, i32
  }
  func.func @transform_3(%arg0: i32, %arg1: i32, %arg2: memref<8xi32, #tpu.memory_space<smem>>, %arg3: memref<1xi32, #tpu.memory_space<smem>>) -> (i32, i32, i32) {
    %0 = arith.index_cast %arg0 : i32 to index
    %1 = memref.load %arg2[%0] : memref<8xi32, #tpu.memory_space<smem>>
    %c0_i32 = arith.constant 0 : i32
    %c0_i32_0 = arith.constant 0 : i32
    return %1, %arg1, %c0_i32 : i32, i32, i32
  }
  func.func @transform_4(%arg0: i32, %arg1: i32, %arg2: memref<8xi32, #tpu.memory_space<smem>>, %arg3: memref<1xi32, #tpu.memory_space<smem>>) -> (i32, i32, i32) {
    %0 = arith.index_cast %arg0 : i32 to index
    %1 = memref.load %arg2[%0] : memref<8xi32, #tpu.memory_space<smem>>
    %c0_i32 = arith.constant 0 : i32
    %c0_i32_0 = arith.constant 0 : i32
    %c0_i32_1 = arith.constant 0 : i32
    return %1, %c0_i32, %c0_i32_0 : i32, i32, i32
  }
  func.func @transform_5(%arg0: i32, %arg1: i32, %arg2: memref<8xi32, #tpu.memory_space<smem>>, %arg3: memref<1xi32, #tpu.memory_space<smem>>) -> (i32, i32) {
    %c0_i32 = arith.constant 0 : i32
    %c0_i32_0 = arith.constant 0 : i32
    return %arg0, %c0_i32 : i32, i32
  }
}

</mosaic_0001>

<llo_original>
// kernel: custom-call.1
$region0: #{custom-call.1}
  %s0 = inlined_call_operand.vmem [shape: u32[8], index: 0, kind: output, shape index: {}]

// kernel: pmoe_forward.1
$region0: #{pmoe_forward.1}
  #allocation0 [shape = 'u32[]', space=smem, size = 0x4, offset = 0x4, fixed_abs, tag = 'smem constant byte address 0x4 - core index']
  #allocation1 [shape = 'u32[144,128]{1,0:T(1,128)}', space=vmem, size = 0x12000, scoped, tag = 'internal scratch']
  #allocation2 [shape = 'f32[128,128]{1,0:T(8,128)}', space=vmem, size = 0x10000, scoped, tag = 'scratch operand']
  #allocation3 [shape = 's32[1]{0}', space=sflag, size = 0x4, scoped, tag = 'scoped memory for pmoe_forward.1']
  #allocation4 [shape = 'u8[512]{0}', space=smem, size = 0x200, scoped, tag = 'prefetched SMEM operand 0']
  #allocation5 [shape = 's32[1]{0:T(128)S(6)}', space=smem, size = 0x200, scoped, tag = 'prefetched SMEM operand 1']
  %s0 = inlined_call_operand.vmem [shape: s32[8], index: 0, kind: input, shape index: {}]
  %s1 = inlined_call_operand.<no memory space> [shape: s32[1], index: 1, kind: input, shape index: {}]
  %s2 = inlined_call_operand.vmem [shape: bf16[1024,128], index: 2, kind: input, shape index: {}]
  %s3 = inlined_call_operand.vmem [shape: bf16[4,128,256], index: 3, kind: input, shape index: {}]
  %s4 = inlined_call_operand.vmem [shape: f32[4,1,256], index: 4, kind: input, shape index: {}]
  %s5 = inlined_call_operand.vmem [shape: bf16[4,256,128], index: 5, kind: input, shape index: {}]
  %s6 = inlined_call_operand.vmem [shape: f32[4,1,128], index: 6, kind: input, shape index: {}]
  %s7 = inlined_call_operand.vmem [shape: bf16[1024,128], index: 7, kind: output, shape index: {}]
  %s8 = sld [smem:[#allocation0]]
  $region110: #{pmoe_forward.1} parent=0
    _
  %s10 = ssub.s32 1, %s8
  %s11 = scalar_select 0, %s10, %s8
  %s12 = sshll.u32 %s0, 4
  %s13 = int_to_ptr.vmem [resolvable:$true] %s12
  %15 = dma.vmem_to_smem %s13, 16, [#allocation4], [#allocation3]
  %16 = sst [smem:[#allocation5]] %s1
  %17 = dma.done [#allocation3], 16
  %18 = sfence
  $region1: #{pmoe_forward.1} parent=0
    #allocation6 [shape = 'u8[65536]{0}', space=vmem, size = 0x10000, scoped, tag = 'input window, operand 3']
    loop: start=0, step=1, limit=18
    $region2: #{pmoe_forward.1} parent=1 // loop_pre_header
      _
    $region3: #{pmoe_forward.1} parent=1 // loop_header
      %s20 = sphi 0, %s24
      %p21 = scmp.ge.s32.totalorder %s20, 18
      %s27 = sphi 0, %s39
      %s28 = sphi 0, %s35
      %s29 = sphi 0, %s27
      %s30 = sphi 0, %s28
      %s31 = sphi 0, %s29
      %s32 = sphi 0, %s30
      %s42 = sphi 0, %s44
      %s45 = sphi 0, %s42
      %s46 = sphi 0, %s45
      %s62 = sphi 0, %s46
      %s72 = sphi 0, %s74
      %s75 = sphi 0, %s72
      %s76 = sphi 0, %s75
      %s92 = sphi 0, %s76
      %s102 = sphi 0, %s104
      %s105 = sphi 0, %s102
      %s106 = sphi 0, %s105
      %s122 = sphi 0, %s106
      %s132 = sphi 0, %s134
      %s135 = sphi 0, %s132
      %s136 = sphi 0, %s135
      %s152 = sphi 0, %s136
      %s160 = sphi 0, %s162
      %s163 = sphi 0, %s160
      %s164 = sphi 0, %s163
      %s180 = sphi 0, %s164
      %s186 = sphi 0, %s188
      %s189 = sphi 0, %s186
      %s190 = sphi 0, %s189
      %s206 = sphi 0, %s190
    $region4: #{pmoe_forward.1} parent=1 // loop_header_branch
      %23 = sbr.rel (%p21) target = $region8
    $region5: #{pmoe_forward.1} parent=1 // loop_body
      %s25 = ssub.s32 %s20, 1
      %s26 = ssub.s32 %s20, 2
      %s33 = sadd.s32 1, %s28
      %p34 = scmp.ge.s32.totalorder %s33, 2
      %s35 = scalar_select %p34, 0, %s33
      %s36 = sadd.s32 1, %s27
      %s37 = scalar_select %p34, %s36, %s27
      %p38 = scmp.ge.s32.totalorder %s37, 8
      %s39 = scalar_select %p38, 0, %s37
      %s40 = ssub.s32 %s27, %s39
      %p41 = scmp.eq.s32.totalorder %s40, 0
      %s43 = sadd.s32 %s42, 1
      %s44 = scalar_select %p41, %s42, %s43
      %p47 = pneg %p41
      %p48 = scmp.eq.s32.totalorder %s20, 15
      %p49 = por %p47, %p48
      %p50 = scmp.ne.s32.totalorder %s42, %s45
      %p51 = scmp.eq.s32.totalorder %s20, 0
      %p52 = por %p50, %p51
      %p53 = scmp.ne.s32.totalorder %s42, %s45
      %p54 = scmp.eq.s32.totalorder %s25, 15
      %p55 = por %p53, %p54
      %p56 = scmp.ne.s32.totalorder %s45, %s46
      %p57 = scmp.eq.s32.totalorder %s25, 0
      %p58 = por %p56, %p57
      %p59 = scmp.ne.s32.totalorder %s45, %s46
      %p60 = scmp.eq.s32.totalorder %s26, 15
      %p61 = por %p59, %p60
      %p63 = scmp.ne.s32.totalorder %s46, %s62
      %p64 = scmp.eq.s32.totalorder %s26, 0
      %p65 = por %p63, %p64
      %s66 = sld [smem:[#allocation4 + %s27]]
      %s67 = sld [smem:[#allocation4 + %s39]]
      %s68 = ssub.s32 %s66, %s67
      %s69 = ssub.s32 %s28, %s35
      %s70 = sor.u32 %s68, %s69
      %p71 = scmp.eq.s32.totalorder %s70, 0
      %s73 = sadd.s32 %s72, 1
      %s74 = scalar_select %p71, %s72, %s73
      %p77 = pneg %p71
      %p78 = scmp.eq.s32.totalorder %s20, 15
      %p79 = por %p77, %p78
      %p80 = scmp.ne.s32.totalorder %s72, %s75
      %p81 = scmp.eq.s32.totalorder %s20, 0
      %p82 = por %p80, %p81
      %p83 = scmp.ne.s32.totalorder %s72, %s75
      %p84 = scmp.eq.s32.totalorder %s25, 15
      %p85 = por %p83, %p84
      %p86 = scmp.ne.s32.totalorder %s75, %s76
      %p87 = scmp.eq.s32.totalorder %s25, 0
      %p88 = por %p86, %p87
      %p89 = scmp.ne.s32.totalorder %s75, %s76
      %p90 = scmp.eq.s32.totalorder %s26, 15
      %p91 = por %p89, %p90
      %p93 = scmp.ne.s32.totalorder %s76, %s92
      %p94 = scmp.eq.s32.totalorder %s26, 0
      %p95 = por %p93, %p94
      %s96 = sld [smem:[#allocation4 + %s27]]
      %s97 = sld [smem:[#allocation4 + %s39]]
      %s98 = ssub.s32 %s96, %s97
      %s99 = ssub.s32 %s28, %s35
      %s100 = sor.u32 %s98, %s99
      %p101 = scmp.eq.s32.totalorder %s100, 0
      %s103 = sadd.s32 %s102, 1
      %s104 = scalar_select %p101, %s102, %s103
      %p107 = pneg %p101
      %p108 = scmp.eq.s32.totalorder %s20, 15
      %p109 = por %p107, %p108
      %p110 = scmp.ne.s32.totalorder %s102, %s105
      %p111 = scmp.eq.s32.totalorder %s20, 0
      %p112 = por %p110, %p111
      %p113 = scmp.ne.s32.totalorder %s102, %s105
      %p114 = scmp.eq.s32.totalorder %s25, 15
      %p115 = por %p113, %p114
      %p116 = scmp.ne.s32.totalorder %s105, %s106
      %p117 = scmp.eq.s32.totalorder %s25, 0
      %p118 = por %p116, %p117
      %p119 = scmp.ne.s32.totalorder %s105, %s106
      %p120 = scmp.eq.s32.totalorder %s26, 15
      %p121 = por %p119, %p120
      %p123 = scmp.ne.s32.totalorder %s106, %s122
      %p124 = scmp.eq.s32.totalorder %s26, 0
      %p125 = por %p123, %p124
      %s126 = sld [smem:[#allocation4 + %s27]]
      %s127 = sld [smem:[#allocation4 + %s39]]
      %s128 = ssub.s32 %s126, %s127
      %s129 = ssub.s32 %s28, %s35
      %s130 = sor.u32 %s128, %s129
      %p131 = scmp.eq.s32.totalorder %s130, 0
      %s133 = sadd.s32 %s132, 1
      %s134 = scalar_select %p131, %s132, %s133
      %p137 = pneg %p131
      %p138 = scmp.eq.s32.totalorder %s20, 15
      %p139 = por %p137, %p138
      %p140 = scmp.ne.s32.totalorder %s132, %s135
      %p141 = scmp.eq.s32.totalorder %s20, 0
      %p142 = por %p140, %p141
      %p143 = scmp.ne.s32.totalorder %s132, %s135
      %p144 = scmp.eq.s32.totalorder %s25, 15
      %p145 = por %p143, %p144
      %p146 = scmp.ne.s32.totalorder %s135, %s136
      %p147 = scmp.eq.s32.totalorder %s25, 0
      %p148 = por %p146, %p147
      %p149 = scmp.ne.s32.totalorder %s135, %s136
      %p150 = scmp.eq.s32.totalorder %s26, 15
      %p151 = por %p149, %p150
      %p153 = scmp.ne.s32.totalorder %s136, %s152
      %p154 = scmp.eq.s32.totalorder %s26, 0
      %p155 = por %p153, %p154
      %s156 = sld [smem:[#allocation4 + %s27]]
      %s157 = sld [smem:[#allocation4 + %s39]]
      %s158 = ssub.s32 %s156, %s157
      %p159 = scmp.eq.s32.totalorder %s158, 0
      %s161 = sadd.s32 %s160, 1
      %s162 = scalar_select %p159, %s160, %s161
      %p165 = pneg %p159
      %p166 = scmp.eq.s32.totalorder %s20, 15
      %p167 = por %p165, %p166
      %p168 = scmp.ne.s32.totalorder %s160, %s163
      %p169 = scmp.eq.s32.totalorder %s20, 0
      %p170 = por %p168, %p169
      %p171 = scmp.ne.s32.totalorder %s160, %s163
      %p172 = scmp.eq.s32.totalorder %s25, 15
      %p173 = por %p171, %p172
      %p174 = scmp.ne.s32.totalorder %s163, %s164
      %p175 = scmp.eq.s32.totalorder %s25, 0
      %p176 = por %p174, %p175
      %p177 = scmp.ne.s32.totalorder %s163, %s164
      %p178 = scmp.eq.s32.totalorder %s26, 15
      %p179 = por %p177, %p178
      %p181 = scmp.ne.s32.totalorder %s164, %s180
      %p182 = scmp.eq.s32.totalorder %s26, 0
      %p183 = por %p181, %p182
      %s184 = ssub.s32 %s27, %s39
      %p185 = scmp.eq.s32.totalorder %s184, 0
      %s187 = sadd.s32 %s186, 1
      %s188 = scalar_select %p185, %s186, %s187
      %p191 = pneg %p185
      %p192 = scmp.eq.s32.totalorder %s20, 15
      %p193 = por %p191, %p192
      %p194 = scmp.ne.s32.totalorder %s186, %s189
      %p195 = scmp.eq.s32.totalorder %s20, 0
      %p196 = por %p194, %p195
      %p197 = scmp.ne.s32.totalorder %s186, %s189
      %p198 = scmp.eq.s32.totalorder %s25, 15
      %p199 = por %p197, %p198
      %p200 = scmp.ne.s32.totalorder %s189, %s190
      %p201 = scmp.eq.s32.totalorder %s25, 0
      %p202 = por %p200, %p201
      %p203 = scmp.ne.s32.totalorder %s189, %s190
      %p204 = scmp.eq.s32.totalorder %s26, 15
      %p205 = por %p203, %p204
      %p207 = scmp.ne.s32.totalorder %s190, %s206
      %p208 = scmp.eq.s32.totalorder %s26, 0
      %p209 = por %p207, %p208
      %p210 = scmp.le.s32.totalorder 1, %s20
      %p211 = scmp.lt.s32.totalorder %s20, 17
      %p212 = pnand %p210, %p211
      %p213 = pneg %p212
      // Predicated region
      $region9: #{pmoe_forward.1} parent=5 // pred_check
        _
      $region10: #{pmoe_forward.1} parent=5 // pred_check_branch
        %215 = sbr.rel (%p212) target = $region12
      $region11: #{pmoe_forward.1} parent=5 // pred_region
        %s216 = ssub.s32 %s20, 1
      $region12: #{pmoe_forward.1} parent=5 // pred_fallthru
        _
      %p217 = scmp.lt.s32.totalorder %s20, 16
      // Predicated region
      $region13: #{pmoe_forward.1} parent=5 // pred_check
        %p218 = pneg %p217
      $region14: #{pmoe_forward.1} parent=5 // pred_check_branch
        %220 = sbr.rel (%p218) target = $region16
      $region15: #{pmoe_forward.1} parent=5 // pred_region
        // Predicated region
        $region17: #{pmoe_forward.1} parent=15 // pred_check
          %p221 = pneg %p52
        $region18: #{pmoe_forward.1} parent=15 // pred_check_branch
          %223 = sbr.rel (%p221) target = $region20
        $region19: #{pmoe_forward.1} parent=15 // pred_region
          %s224 = smul.u32 16, %s27
          %p225 = scmp.lt.s32.totalorder %s224, 127
          %s226 = scalar_select %p225, %s224, 127
          %s227 = smul.addr %s226, 4
          %s228 = scalar_lea.vmem %s2, %s227
          %s229 = smul.u32 16, %s27
        $region20: #{pmoe_forward.1} parent=15 // pred_fallthru
          _
        // Predicated region
        $region21: #{pmoe_forward.1} parent=15 // pred_check
          %p230 = pneg %p82
        $region22: #{pmoe_forward.1} parent=15 // pred_check_branch
          %232 = sbr.rel (%p230) target = $region24
        $region23: #{pmoe_forward.1} parent=15 // pred_region
          %s233 = sand.u32 %s72, 1
          %s234 = sand.u32 %s72, 1
          %s235 = smul.addr %s234, 64
          %s236 = scalar_lea.vmem [#allocation6], %s235
          %s237 = sld [smem:[#allocation4 + %s27]]
          %s238 = smul.addr %s237, 32
          %s239 = sadd.s32 %s28, %s238
          %s240 = smul.addr %s239, 4
          %s241 = scalar_lea.vmem %s3, %s240
          // Predicated region
          $region25: #{pmoe_forward.1} parent=23 // pred_check
            _
          $region26: #{pmoe_forward.1} parent=23 // pred_check_branch
            %243 = sbr.rel (0) target = $region28
          $region27: #{pmoe_forward.1} parent=23 // pred_region
            // Predicated region
            $region29: #{pmoe_forward.1} parent=27 // pred_check
              _
            $region30: #{pmoe_forward.1} parent=27 // pred_check_branch
              %245 = sbr.rel target = $region32
            $region31: #{pmoe_forward.1} parent=27 // pred_region
              // Predicated region
              $region44: #{pmoe_forward.1} parent=31 // pred_check
                _
              $region45: #{pmoe_forward.1} parent=31 // pred_check_branch
                %291 = sbr.rel (0) target = $region47
              $region46: #{pmoe_forward.1} parent=31 // pred_region
                loop: start=0, step=1, limit=1
                $region48: #{pmoe_forward.1} parent=46 // loop_pre_header
                  _
                $region49: #{pmoe_forward.1} parent=46 // loop_header
                  %s293 = sphi 0, %s297
                  %p294 = scmp.ge.s32.totalorder %s293, 1
                  %s298 = sphi %s241, %s241
                  %s299 = sphi %s236, %s236
                $region50: #{pmoe_forward.1} parent=46 // loop_header_branch
                  %296 = sbr.rel (%p294) target = $region54
                $region51: #{pmoe_forward.1} parent=46 // loop_body
                  _
                $region52: #{pmoe_forward.1} parent=46 // loop_footer
                  %s297 = sadd.s32 1, %s293
                $region53: #{pmoe_forward.1} parent=46 // loop_footer_branch
                  %292 = sbr.rel target = $region49
                $region54: #{pmoe_forward.1} parent=46 // loop_exit
                  _
                %s301 = ssub.s32 16, 1
                loop: start=0, step=1, limit=1
                $region55: #{pmoe_forward.1} parent=46 // loop_pre_header
                  _
                $region56: #{pmoe_forward.1} parent=46 // loop_header
                  %s303 = sphi 0, %s307
                  %p304 = scmp.ge.s32.totalorder %s303, 1
                  %s308 = sphi %s241, %s241
                  %s309 = sphi %s236, %s236
                $region57: #{pmoe_forward.1} parent=46 // loop_header_branch
                  %306 = sbr.rel (%p304) target = $region61
                $region58: #{pmoe_forward.1} parent=46 // loop_body
                  %v310 = vld [vmem:[%s308] sm:%s301]
                  %311 = vst [vmem:[%s309] sm:%s301] %v310
                  %v312 = vld [vmem:[%s308 + $0x8] sm:%s301]
                  %313 = vst [vmem:[%s309 + $0x4] sm:%s301] %v312
                  %v314 = vld [vmem:[%s308 + $0x10] sm:%s301]
                  %315 = vst [vmem:[%s309 + $0x8] sm:%s301] %v314
                  %v316 = vld [vmem:[%s308 + $0x18] sm:%s301]
                  %317 = vst [vmem:[%s309 + $0xc] sm:%s301] %v316
                  %v318 = vld [vmem:[%s308 + $0x20] sm:%s301]
                  %319 = vst [vmem:[%s309 + $0x10] sm:%s301] %v318
                  %v320 = vld [vmem:[%s308 + $0x28] sm:%s301]
                  %321 = vst [vmem:[%s309 + $0x14] sm:%s301] %v320
                  %v322 = vld [vmem:[%s308 + $0x30] sm:%s301]
                  %323 = vst [vmem:[%s309 + $0x18] sm:%s301] %v322
                  %v324 = vld [vmem:[%s308 + $0x38] sm:%s301]
                  %325 = vst [vmem:[%s309 + $0x1c] sm:%s301] %v324
                  %v326 = vld [vmem:[%s308 + $0x40] sm:%s301]
                  %327 = vst [vmem:[%s309 + $0x20] sm:%s301] %v326
                  %v328 = vld [vmem:[%s308 + $0x48] sm:%s301]
                  %329 = vst [vmem:[%s309 + $0x24] sm:%s301] %v328
                  %v330 = vld [vmem:[%s308 + $0x50] sm:%s301]
                  %331 = vst [vmem:[%s309 + $0x28] sm:%s301] %v330
                  %v332 = vld [vmem:[%s308 + $0x58] sm:%s301]
                  %333 = vst [vmem:[%s309 + $0x2c] sm:%s301] %v332
                  %v334 = vld [vmem:[%s308 + $0x60] sm:%s301]
                  %335 = vst [vmem:[%s309 + $0x30] sm:%s301] %v334
                  %v336 = vld [vmem:[%s308 + $0x68] sm:%s301]
                  %337 = vst [vmem:[%s309 + $0x34] sm:%s301] %v336
                  %v338 = vld [vmem:[%s308 + $0x70] sm:%s301]
                  %339 = vst [vmem:[%s309 + $0x38] sm:%s301] %v338
                  %v340 = vld [vmem:[%s308 + $0x78] sm:%s301]
                  %341 = vst [vmem:[%s309 + $0x3c] sm:%s301] %v340
                $region59: #{pmoe_forward.1} parent=46 // loop_footer
                  %s307 = sadd.s32 1, %s303
                $region60: #{pmoe_forward.1} parent=46 // loop_footer_branch
                  %302 = sbr.rel target = $region56
                $region61: #{pmoe_forward.1} parent=46 // loop_exit
                  _
              $region47: #{pmoe_forward.1} parent=31 // pred_fallthru
                _
            $region32: #{pmoe_forward.1} parent=27 // pred_fallthru
              _
            // Predicated region
            $region33: #{pmoe_forward.1} parent=27 // pred_check
              _
            $region34: #{pmoe_forward.1} parent=27 // pred_check_branch
              %247 = sbr.rel (0) target = $region36
            $region35: #{pmoe_forward.1} parent=27 // pred_region
              %s249 = ssub.s32 16, 1
              loop: start=0, step=1, limit=1
              $region37: #{pmoe_forward.1} parent=35 // loop_pre_header
                _
              $region38: #{pmoe_forward.1} parent=35 // loop_header
                %s251 = sphi 0, %s255
                %p252 = scmp.ge.s32.totalorder %s251, 1
                %s256 = sphi %s241, %s241
                %s257 = sphi %s236, %s236
              $region39: #{pmoe_forward.1} parent=35 // loop_header_branch
                %254 = sbr.rel (%p252) target = $region43
              $region40: #{pmoe_forward.1} parent=35 // loop_body
                %v258 = vld [vmem:[%s256] sm:%s249]
                %259 = vst [vmem:[%s257] sm:%s249] %v258
                %v260 = vld [vmem:[%s256 + $0x8] sm:%s249]
                %261 = vst [vmem:[%s257 + $0x4] sm:%s249] %v260
                %v262 = vld [vmem:[%s256 + $0x10] sm:%s249]
                %263 = vst [vmem:[%s257 + $0x8] sm:%s249] %v262
                %v264 = vld [vmem:[%s256 + $0x18] sm:%s249]
                %265 = vst [vmem:[%s257 + $0xc] sm:%s249] %v264
                %v266 = vld [vmem:[%s256 + $0x20] sm:%s249]
                %267 = vst [vmem:[%s257 + $0x10] sm:%s249] %v266
                %v268 = vld [vmem:[%s256 + $0x28] sm:%s249]
                %269 = vst [vmem:[%s257 + $0x14] sm:%s249] %v268
                %v270 = vld [vmem:[%s256 + $0x30] sm:%s249]
                %271 = vst [vmem:[%s257 + $0x18] sm:%s249] %v270
                %v272 = vld [vmem:[%s256 + $0x38] sm:%s249]
                %273 = vst [vmem:[%s257 + $0x1c] sm:%s249] %v272
                %v274 = vld [vmem:[%s256 + $0x40] sm:%s249]
                %275 = vst [vmem:[%s257 + $0x20] sm:%s249] %v274
                %v276 = vld [vmem:[%s256 + $0x48] sm:%s249]
                %277 = vst [vmem:[%s257 + $0x24] sm:%s249] %v276
                %v278 = vld [vmem:[%s256 + $0x50] sm:%s249]
                %279 = vst [vmem:[%s257 + $0x28] sm:%s249] %v278
                %v280 = vld [vmem:[%s256 + $0x58] sm:%s249]
                %281 = vst [vmem:[%s257 + $0x2c] sm:%s249] %v280
                %v282 = vld [vmem:[%s256 + $0x60] sm:%s249]
                %283 = vst [vmem:[%s257 + $0x30] sm:%s249] %v282
                %v284 = vld [vmem:[%s256 + $0x68] sm:%s249]
                %285 = vst [vmem:[%s257 + $0x34] sm:%s249] %v284
                %v286 = vld [vmem:[%s256 + $0x70] sm:%s249]
                %287 = vst [vmem:[%s257 + $0x38] sm:%s249] %v286
                %v288 = vld [vmem:[%s256 + $0x78] sm:%s249]
                %289 = vst [vmem:[%s257 + $0x3c] sm:%s249] %v288
              $region41: #{pmoe_forward.1} parent=35 // loop_footer
                %s255 = sadd.s32 1, %s251
              $region42: #{pmoe_forward.1} parent=35 // loop_footer_branch
                %250 = sbr.rel target = $region38
              $region43: #{pmoe_forward.1} parent=35 // loop_exit
                _
            $region36: #{pmoe_forward.1} parent=27 // pred_fallthru
              _
          $region28: #{pmoe_forward.1} parent=23 // pred_fallthru
            _
          %342 = vnop
        $region24: #{pmoe_forward.1} parent=15 // pred_fallthru
          _
        // Predicated region
        $region62: #{pmoe_forward.1} parent=15 // pred_check
          %p343 = pneg %p112
        $region63: #{pmoe_forward.1} parent=15 // pred_check_branch
          %345 = sbr.rel (%p343) target = $region65
        $region64: #{pmoe_forward.1} parent=15 // pred_region
          %s346 = sld [smem:[#allocation4 + %s27]]
          %p347 = scmp.lt.s32.totalorder %s346, 3
          %s348 = scalar_select %p347, %s346, 3
          %p349 = scmp.lt.s32.totalorder %s28, 1
          %s350 = scalar_select %p349, %s28, 1
          %s351 = smul.addr %s348, 2
          %s352 = sadd.s32 %s350, %s351
          %s353 = scalar_lea.vmem %s4, %s352
          %s354 = sld [smem:[#allocation4 + %s27]]
        $region65: #{pmoe_forward.1} parent=15 // pred_fallthru
          _
        // Predicated region
        $region66: #{pmoe_forward.1} parent=15 // pred_check
          %p355 = pneg %p142
        $region67: #{pmoe_forward.1} parent=15 // pred_check_branch
          %357 = sbr.rel (%p355) target = $region69
        $region68: #{pmoe_forward.1} parent=15 // pred_region
          %s358 = sld [smem:[#allocation4 + %s27]]
          %s359 = smul.u32 16, %s28
          %p360 = scmp.lt.s32.totalorder %s358, 3
          %s361 = scalar_select %p360, %s358, 3
          %p362 = scmp.lt.s32.totalorder %s359, 31
          %s363 = scalar_select %p362, %s359, 31
          %s364 = smul.addr %s361, 32
          %s365 = sadd.s32 %s363, %s364
          %s366 = smul.addr %s365, 4
          %s367 = scalar_lea.vmem %s5, %s366
          %s368 = sld [smem:[#allocation4 + %s27]]
          %s369 = smul.u32 16, %s28
        $region69: #{pmoe_forward.1} parent=15 // pred_fallthru
          _
        // Predicated region
        $region70: #{pmoe_forward.1} parent=15 // pred_check
          %p370 = pneg %p170
        $region71: #{pmoe_forward.1} parent=15 // pred_check_branch
          %372 = sbr.rel (%p370) target = $region73
        $region72: #{pmoe_forward.1} parent=15 // pred_region
          %s373 = sld [smem:[#allocation4 + %s27]]
          %p374 = scmp.lt.s32.totalorder %s373, 3
          %s375 = scalar_select %p374, %s373, 3
          %s376 = scalar_lea.vmem %s6, %s375
          %s377 = sld [smem:[#allocation4 + %s27]]
        $region73: #{pmoe_forward.1} parent=15 // pred_fallthru
          _
      $region16: #{pmoe_forward.1} parent=5 // pred_fallthru
        _
      %p378 = scmp.le.s32.totalorder 1, %s20
      %p379 = scmp.lt.s32.totalorder %s20, 17
      %p380 = pnand %p378, %p379
      %p381 = pneg %p380
      // Predicated region
      $region74: #{pmoe_forward.1} parent=5 // pred_check
        _
      $region75: #{pmoe_forward.1} parent=5 // pred_check_branch
        %383 = sbr.rel (%p380) target = $region77
      $region76: #{pmoe_forward.1} parent=5 // pred_region
        %s384 = ssub.s32 %s20, 1
        %s385 = sand.u32 %s75, 1
        %s386 = sand.u32 %s75, 1
        %s387 = smul.addr %s386, 64
        %s388 = scalar_lea.vmem [#allocation6], %s387
        // Predicated region
        $region78: #{pmoe_forward.1} parent=76 // pred_check
          %p389 = pneg %p88
        $region79: #{pmoe_forward.1} parent=76 // pred_check_branch
          %391 = sbr.rel (%p389) target = $region81
        $region80: #{pmoe_forward.1} parent=76 // pred_region
          _
        $region81: #{pmoe_forward.1} parent=76 // pred_fallthru
          _
        %s392 = smul.u32 16, %s29
        %p393 = scmp.lt.s32.totalorder %s392, 127
        %s394 = scalar_select %p393, %s392, 127
        %s395 = smul.addr %s394, 4
        %s396 = scalar_lea.vmem %s2, %s395
        %p397 = pneg %p58
        %p398 = pneg %p55
        %s399 = sand.u32 %s75, 1
        %s400 = sand.u32 %s75, 1
        %s401 = smul.addr %s400, 64
        %s402 = scalar_lea.vmem [#allocation6], %s401
        %p403 = pneg %p88
        %p404 = pneg %p85
        %s405 = sld [smem:[#allocation4 + %s29]]
        %p406 = scmp.lt.s32.totalorder %s405, 3
        %s407 = scalar_select %p406, %s405, 3
        %p408 = scmp.lt.s32.totalorder %s30, 1
        %s409 = scalar_select %p408, %s30, 1
        %s410 = smul.addr %s407, 2
        %s411 = sadd.s32 %s409, %s410
        %s412 = scalar_lea.vmem %s4, %s411
        %p413 = pneg %p118
        %p414 = pneg %p115
        %s415 = sld [smem:[#allocation4 + %s29]]
        %s416 = smul.u32 16, %s30
        %p417 = scmp.lt.s32.totalorder %s415, 3
        %s418 = scalar_select %p417, %s415, 3
        %p419 = scmp.lt.s32.totalorder %s416, 31
        %s420 = scalar_select %p419, %s416, 31
        %s421 = smul.addr %s418, 32
        %s422 = sadd.s32 %s420, %s421
        %s423 = smul.addr %s422, 4
        %s424 = scalar_lea.vmem %s5, %s423
        %p425 = pneg %p148
        %p426 = pneg %p145
        %s427 = sld [smem:[#allocation4 + %s29]]
        %p428 = scmp.lt.s32.totalorder %s427, 3
        %s429 = scalar_select %p428, %s427, 3
        %s430 = scalar_lea.vmem %s6, %s429
        %p431 = pneg %p176
        %p432 = pneg %p173
        %p433 = pneg %p202
        %p434 = pneg %p199
        %s435 = smul.u32 16, %s29
        %p436 = scmp.lt.s32.totalorder %s435, 127
        %s437 = scalar_select %p436, %s435, 127
        %s438 = smul.addr %s437, 4
        %s439 = scalar_lea.vmem %s7, %s438
        %s440 = smul.u32 16, %s29
        %p441 = scmp.lt.s32.totalorder %s440, 127
        %s442 = scalar_select %p441, %s440, 127
        %s443 = smul.addr %s442, 4
        %s444 = scalar_lea.vmem %s2, %s443
        %s445 = smul.u32 16, %s29
        %s446 = sld [smem:[#allocation4 + %s29]]
        %s447 = sld [smem:[#allocation4 + %s29]]
        %p448 = scmp.lt.s32.totalorder %s447, 3
        %s449 = scalar_select %p448, %s447, 3
        %p450 = scmp.lt.s32.totalorder %s30, 1
        %s451 = scalar_select %p450, %s30, 1
        %s452 = smul.addr %s449, 2
        %s453 = sadd.s32 %s451, %s452
        %s454 = scalar_lea.vmem %s4, %s453
        %s455 = sld [smem:[#allocation4 + %s29]]
        %s456 = sld [smem:[#allocation4 + %s29]]
        %s457 = smul.u32 16, %s30
        %p458 = scmp.lt.s32.totalorder %s456, 3
        %s459 = scalar_select %p458, %s456, 3
        %p460 = scmp.lt.s32.totalorder %s457, 31
        %s461 = scalar_select %p460, %s457, 31
        %s462 = smul.addr %s459, 32
        %s463 = sadd.s32 %s461, %s462
        %s464 = smul.addr %s463, 4
        %s465 = scalar_lea.vmem %s5, %s464
        %s466 = sld [smem:[#allocation4 + %s29]]
        %s467 = smul.u32 16, %s30
        %s468 = sld [smem:[#allocation4 + %s29]]
        %p469 = scmp.lt.s32.totalorder %s468, 3
        %s470 = scalar_select %p469, %s468, 3
        %s471 = scalar_lea.vmem %s6, %s470
        %s472 = sld [smem:[#allocation4 + %s29]]
        %s473 = smul.u32 16, %s29
        %p474 = scmp.lt.s32.totalorder %s473, 127
        %s475 = scalar_select %p474, %s473, 127
        %s476 = smul.addr %s475, 4
        %s477 = scalar_lea.vmem %s7, %s476
        %s478 = smul.u32 16, %s29
        %s480 = sld [smem:[#allocation5]]
        %p481 = scmp.lt.s32.totalorder %s29, %s480
        %p482 = scmp.eq.s32.totalorder %s30, 1
        %p483 = scmp.eq.s32.totalorder %s30, 0
        %p484 = pnand %p481, %p483
        %p485 = pneg %p484
        // Predicated region
        $region82: #{pmoe_forward.1} parent=76 // pred_check
          _
        $region83: #{pmoe_forward.1} parent=76 // pred_check_branch
          %487 = sbr.rel (%p484) target = $region85
        $region84: #{pmoe_forward.1} parent=76 // pred_region
          %488 = vst [vmem:[#allocation2] sm:$0xff] 0.0
          %489 = vst [vmem:[#allocation2 + $0x8] sm:$0xff] 0.0
          %490 = vst [vmem:[#allocation2 + $0x10] sm:$0xff] 0.0
          %491 = vst [vmem:[#allocation2 + $0x18] sm:$0xff] 0.0
          %492 = vst [vmem:[#allocation2 + $0x20] sm:$0xff] 0.0
          %493 = vst [vmem:[#allocation2 + $0x28] sm:$0xff] 0.0
          %494 = vst [vmem:[#allocation2 + $0x30] sm:$0xff] 0.0
          %495 = vst [vmem:[#allocation2 + $0x38] sm:$0xff] 0.0
          %496 = vst [vmem:[#allocation2 + $0x40] sm:$0xff] 0.0
          %497 = vst [vmem:[#allocation2 + $0x48] sm:$0xff] 0.0
          %498 = vst [vmem:[#allocation2 + $0x50] sm:$0xff] 0.0
          %499 = vst [vmem:[#allocation2 + $0x58] sm:$0xff] 0.0
          %500 = vst [vmem:[#allocation2 + $0x60] sm:$0xff] 0.0
          %501 = vst [vmem:[#allocation2 + $0x68] sm:$0xff] 0.0
          %502 = vst [vmem:[#allocation2 + $0x70] sm:$0xff] 0.0
          %503 = vst [vmem:[#allocation2 + $0x78] sm:$0xff] 0.0
        $region85: #{pmoe_forward.1} parent=76 // pred_fallthru
          _
        // Predicated region
        $region86: #{pmoe_forward.1} parent=76 // pred_check
          %p504 = pneg %p481
        $region87: #{pmoe_forward.1} parent=76 // pred_check_branch
          %506 = sbr.rel (%p504) target = $region89
        $region88: #{pmoe_forward.1} parent=76 // pred_region
          %v507 = vld [vmem:[%s444] sm:$0xf]
          %v508 = vld [vmem:[%s444 + $0x4] sm:$0xf]
          %v509 = vld [vmem:[%s444 + $0x8] sm:$0xf]
          %v510 = vld [vmem:[%s444 + $0xc] sm:$0xf]
          %v511 = vld [vmem:[%s444 + $0x10] sm:$0xf]
          %v512 = vld [vmem:[%s444 + $0x14] sm:$0xf]
          %v513 = vld [vmem:[%s444 + $0x18] sm:$0xf]
          %v514 = vld [vmem:[%s444 + $0x1c] sm:$0xf]
          %v515 = vld [vmem:[%s444 + $0x20] sm:$0xf]
          %v516 = vld [vmem:[%s444 + $0x24] sm:$0xf]
          %v517 = vld [vmem:[%s444 + $0x28] sm:$0xf]
          %v518 = vld [vmem:[%s444 + $0x2c] sm:$0xf]
          %v519 = vld [vmem:[%s444 + $0x30] sm:$0xf]
          %v520 = vld [vmem:[%s444 + $0x34] sm:$0xf]
          %v521 = vld [vmem:[%s444 + $0x38] sm:$0xf]
          %v522 = vld [vmem:[%s444 + $0x3c] sm:$0xf]
          %v523 = vld [vmem:[%s388] sm:$0xf]
          %v524 = vld [vmem:[%s388 + $0x4] sm:$0xf]
          %v525 = vld [vmem:[%s388 + $0x8] sm:$0xf]
          %v526 = vld [vmem:[%s388 + $0xc] sm:$0xf]
          %v527 = vld [vmem:[%s388 + $0x10] sm:$0xf]
          %v528 = vld [vmem:[%s388 + $0x14] sm:$0xf]
          %v529 = vld [vmem:[%s388 + $0x18] sm:$0xf]
          %v530 = vld [vmem:[%s388 + $0x1c] sm:$0xf]
          %v531 = vld [vmem:[%s388 + $0x20] sm:$0xf]
          %v532 = vld [vmem:[%s388 + $0x24] sm:$0xf]
          %v533 = vld [vmem:[%s388 + $0x28] sm:$0xf]
          %v534 = vld [vmem:[%s388 + $0x2c] sm:$0xf]
          %v535 = vld [vmem:[%s388 + $0x30] sm:$0xf]
          %v536 = vld [vmem:[%s388 + $0x34] sm:$0xf]
          %v537 = vld [vmem:[%s388 + $0x38] sm:$0xf]
          %v538 = vld [vmem:[%s388 + $0x3c] sm:$0xf]
          %v539 = vld [vmem:[%s454] sm:$0x1]
          %v541 = vlaneseq
          %v542 = vshrl.u32 %v541, 7
          %v543 = vsub.s32 0, %v542
          %v544 = vrot.slane %v539, %v543
          %v562 = vunpack.c.l.b16 %v507
          %v563 = vunpack.c.l.b16 %v508
          %v564 = vunpack.c.l.b16 %v509
          %v565 = vunpack.c.l.b16 %v510
          %v566 = vunpack.c.l.b16 %v511
          %v567 = vunpack.c.l.b16 %v512
          %v568 = vunpack.c.l.b16 %v513
          %v569 = vunpack.c.l.b16 %v514
          %v570 = vunpack.c.l.b16 %v515
          %v571 = vunpack.c.l.b16 %v516
          %v572 = vunpack.c.l.b16 %v517
          %v573 = vunpack.c.l.b16 %v518
          %v574 = vunpack.c.l.b16 %v519
          %v575 = vunpack.c.l.b16 %v520
          %v576 = vunpack.c.l.b16 %v521
          %v577 = vunpack.c.l.b16 %v522
          %v578 = vpack.c.b16 %v563, %v562
          %v579 = vpack.c.b16 %v565, %v564
          %v580 = vpack.c.b16 %v567, %v566
          %v581 = vpack.c.b16 %v569, %v568
          %v582 = vpack.c.b16 %v571, %v570
          %v583 = vpack.c.b16 %v573, %v572
          %v584 = vpack.c.b16 %v575, %v574
          %v585 = vpack.c.b16 %v577, %v576
          %v610 = vunpack.c.l.b16 %v523
          %v611 = vunpack.c.l.b16 %v524
          %v612 = vunpack.c.l.b16 %v525
          %v613 = vunpack.c.l.b16 %v526
          %v614 = vunpack.c.l.b16 %v527
          %v615 = vunpack.c.l.b16 %v528
          %v616 = vunpack.c.l.b16 %v529
          %v617 = vunpack.c.l.b16 %v530
          %v618 = vunpack.c.l.b16 %v531
          %v619 = vunpack.c.l.b16 %v532
          %v620 = vunpack.c.l.b16 %v533
          %v621 = vunpack.c.l.b16 %v534
          %v622 = vunpack.c.l.b16 %v535
          %v623 = vunpack.c.l.b16 %v536
          %v624 = vunpack.c.l.b16 %v537
          %v625 = vunpack.c.l.b16 %v538
          %v626 = vpack.c.b16 %v611, %v610
          %v627 = vpack.c.b16 %v613, %v612
          %v628 = vpack.c.b16 %v615, %v614
          %v629 = vpack.c.b16 %v617, %v616
          %v630 = vpack.c.b16 %v619, %v618
          %v631 = vpack.c.b16 %v621, %v620
          %v632 = vpack.c.b16 %v623, %v622
          %v633 = vpack.c.b16 %v625, %v624
          %642 = vmatprep.subr.bf16.mxu0 0
          %643 = vmatpush1.bf16.msra.mxu0 %v633
          %644 = vmatprep.subr.bf16.mxu0 0
          %645 = vmatpush1.bf16.msra.mxu0 %v632
          %646 = vmatprep.subr.bf16.mxu0 0
          %647 = vmatpush1.bf16.msra.mxu0 %v631
          %648 = vmatprep.subr.bf16.mxu0 0
          %649 = vmatpush1.bf16.msra.mxu0 %v630
          %650 = vmatprep.subr.bf16.mxu0 0
          %651 = vmatpush1.bf16.msra.mxu0 %v629
          %652 = vmatprep.subr.bf16.mxu0 0
          %653 = vmatpush1.bf16.msra.mxu0 %v628
          %654 = vmatprep.subr.bf16.mxu0 0
          %655 = vmatpush1.bf16.msra.mxu0 %v627
          %656 = vmatprep.subr.bf16.mxu0 0
          %657 = vmatpush1.bf16.msra.mxu0 %v626
          %658 = vmatprep.subr.bf16.mxu0 0
          %659 = vmatpush2.bf16.msra.mxu0 0
          %660 = vmatprep.subr.bf16.mxu0 0
          %661 = vmatpush2.bf16.msra.mxu0 0
          %662 = vmatprep.subr.bf16.mxu0 0
          %663 = vmatpush2.bf16.msra.mxu0 0
          %664 = vmatprep.subr.bf16.mxu0 0
          %665 = vmatpush2.bf16.msra.mxu0 0
          %666 = vmatprep.subr.bf16.mxu0 0
          %667 = vmatpush2.bf16.msra.mxu0 0
          %668 = vmatprep.subr.bf16.mxu0 0
          %669 = vmatpush2.bf16.msra.mxu0 0
          %670 = vmatprep.subr.bf16.mxu0 0
          %671 = vmatpush2.bf16.msra.mxu0 0
          %672 = vmatprep.subr.bf16.mxu0 0
          %673 = vmatpush2.bf16.msra.mxu0 0
          %674 = vmatprep.mubr.bf16.mxu0 0
          %675 = vmatmul.mubr.bf16.gmra.mxu0 %v578
          %v676 = vpop.f32.mrf.mxu0
          %v677 = vadd.f32 %v544, %v676
          %v678 = vpop.f32.mrf.mxu0
          %v679 = vpop.f32.mrf.mxu0
          %v680 = vadd.f32 %v544, %v679
          %v681 = vpop.f32.mrf.mxu0
          %682 = vmatprep.mubr.bf16.mxu0 0
          %683 = vmatmul.mubr.bf16.gmra.mxu0 %v579
          %v684 = vpop.f32.mrf.mxu0
          %v685 = vadd.f32 %v544, %v684
          %v686 = vpop.f32.mrf.mxu0
          %v687 = vpop.f32.mrf.mxu0
          %v688 = vadd.f32 %v544, %v687
          %v689 = vpop.f32.mrf.mxu0
          %690 = vmatprep.mubr.bf16.mxu0 0
          %691 = vmatmul.mubr.bf16.gmra.mxu0 %v580
          %v692 = vpop.f32.mrf.mxu0
          %v693 = vadd.f32 %v544, %v692
          %v694 = vpop.f32.mrf.mxu0
          %v695 = vpop.f32.mrf.mxu0
          %v696 = vadd.f32 %v544, %v695
          %v697 = vpop.f32.mrf.mxu0
          %698 = vmatprep.mubr.bf16.mxu0 0
          %699 = vmatmul.mubr.bf16.gmra.mxu0 %v581
          %v700 = vpop.f32.mrf.mxu0
          %v701 = vadd.f32 %v544, %v700
          %v702 = vpop.f32.mrf.mxu0
          %v703 = vpop.f32.mrf.mxu0
          %v704 = vadd.f32 %v544, %v703
          %v705 = vpop.f32.mrf.mxu0
          %706 = vmatprep.mubr.bf16.mxu0 0
          %707 = vmatmul.mubr.bf16.gmra.mxu0 %v582
          %v708 = vpop.f32.mrf.mxu0
          %v709 = vadd.f32 %v544, %v708
          %v710 = vpop.f32.mrf.mxu0
          %v711 = vpop.f32.mrf.mxu0
          %v712 = vadd.f32 %v544, %v711
          %v713 = vpop.f32.mrf.mxu0
          %714 = vmatprep.mubr.bf16.mxu0 0
          %715 = vmatmul.mubr.bf16.gmra.mxu0 %v583
          %v716 = vpop.f32.mrf.mxu0
          %v717 = vadd.f32 %v544, %v716
          %v718 = vpop.f32.mrf.mxu0
          %v719 = vpop.f32.mrf.mxu0
          %v720 = vadd.f32 %v544, %v719
          %v721 = vpop.f32.mrf.mxu0
          %722 = vmatprep.mubr.bf16.mxu0 0
          %723 = vmatmul.mubr.bf16.gmra.mxu0 %v584
          %v724 = vpop.f32.mrf.mxu0
          %v725 = vadd.f32 %v544, %v724
          %v726 = vpop.f32.mrf.mxu0
          %v727 = vpop.f32.mrf.mxu0
          %v728 = vadd.f32 %v544, %v727
          %v729 = vpop.f32.mrf.mxu0
          %730 = vmatprep.mubr.bf16.mxu0 0
          %731 = vmatmul.mubr.bf16.gmra.mxu0 %v585
          %v732 = vpop.f32.mrf.mxu0
          %v733 = vadd.f32 %v544, %v732
          %v734 = vpop.f32.mrf.mxu0
          %v735 = vpop.f32.mrf.mxu0
          %v736 = vadd.f32 %v544, %v735
          %v737 = vpop.f32.mrf.mxu0
          %738 = vdwg.mxu0
          %v739 = vmul.f32 %v677, 0.5
          %v740 = vmul.f32 %v680, 0.5
          %v741 = vmul.f32 %v685, 0.5
          %v742 = vmul.f32 %v688, 0.5
          %v743 = vmul.f32 %v693, 0.5
          %v744 = vmul.f32 %v696, 0.5
          %v745 = vmul.f32 %v701, 0.5
          %v746 = vmul.f32 %v704, 0.5
          %v747 = vmul.f32 %v709, 0.5
          %v748 = vmul.f32 %v712, 0.5
          %v749 = vmul.f32 %v717, 0.5
          %v750 = vmul.f32 %v720, 0.5
          %v751 = vmul.f32 %v725, 0.5
          %v752 = vmul.f32 %v728, 0.5
          %v753 = vmul.f32 %v733, 0.5
          %v754 = vmul.f32 %v736, 0.5
          %v755 = vmul.f32 %v677, 0.70710677
          %v756 = vmul.f32 %v680, 0.70710677
          %v757 = vmul.f32 %v685, 0.70710677
          %v758 = vmul.f32 %v688, 0.70710677
          %v759 = vmul.f32 %v693, 0.70710677
          %v760 = vmul.f32 %v696, 0.70710677
          %v761 = vmul.f32 %v701, 0.70710677
          %v762 = vmul.f32 %v704, 0.70710677
          %v763 = vmul.f32 %v709, 0.70710677
          %v764 = vmul.f32 %v712, 0.70710677
          %v765 = vmul.f32 %v717, 0.70710677
          %v766 = vmul.f32 %v720, 0.70710677
          %v767 = vmul.f32 %v725, 0.70710677
          %v768 = vmul.f32 %v728, 0.70710677
          %v769 = vmul.f32 %v733, 0.70710677
          %v770 = vmul.f32 %v736, 0.70710677
          %vm771 = vcmp.ge.f32.partialorder %v755, 0.0
          %vm772 = vcmp.ge.f32.partialorder %v756, 0.0
          %vm773 = vcmp.ge.f32.partialorder %v757, 0.0
          %vm774 = vcmp.ge.f32.partialorder %v758, 0.0
          %vm775 = vcmp.ge.f32.partialorder %v759, 0.0
          %vm776 = vcmp.ge.f32.partialorder %v760, 0.0
          %vm777 = vcmp.ge.f32.partialorder %v761, 0.0
          %vm778 = vcmp.ge.f32.partialorder %v762, 0.0
          %vm779 = vcmp.ge.f32.partialorder %v763, 0.0
          %vm780 = vcmp.ge.f32.partialorder %v764, 0.0
          %vm781 = vcmp.ge.f32.partialorder %v765, 0.0
          %vm782 = vcmp.ge.f32.partialorder %v766, 0.0
          %vm783 = vcmp.ge.f32.partialorder %v767, 0.0
          %vm784 = vcmp.ge.f32.partialorder %v768, 0.0
          %vm785 = vcmp.ge.f32.partialorder %v769, 0.0
          %vm786 = vcmp.ge.f32.partialorder %v770, 0.0
          %v787 = vsel %vm771, 1.0, -1.0
          %v788 = vsel %vm772, 1.0, -1.0
          %v789 = vsel %vm773, 1.0, -1.0
          %v790 = vsel %vm774, 1.0, -1.0
          %v791 = vsel %vm775, 1.0, -1.0
          %v792 = vsel %vm776, 1.0, -1.0
          %v793 = vsel %vm777, 1.0, -1.0
          %v794 = vsel %vm778, 1.0, -1.0
          %v795 = vsel %vm779, 1.0, -1.0
          %v796 = vsel %vm780, 1.0, -1.0
          %v797 = vsel %vm781, 1.0, -1.0
          %v798 = vsel %vm782, 1.0, -1.0
          %v799 = vsel %vm783, 1.0, -1.0
          %v800 = vsel %vm784, 1.0, -1.0
          %v801 = vsel %vm785, 1.0, -1.0
          %v802 = vsel %vm786, 1.0, -1.0
          %v803 = vand.u32 2147483647, %v755
          %v804 = vand.u32 2147483647, %v756
          %v805 = vand.u32 2147483647, %v757
          %v806 = vand.u32 2147483647, %v758
          %v807 = vand.u32 2147483647, %v759
          %v808 = vand.u32 2147483647, %v760
          %v809 = vand.u32 2147483647, %v761
          %v810 = vand.u32 2147483647, %v762
          %v811 = vand.u32 2147483647, %v763
          %v812 = vand.u32 2147483647, %v764
          %v813 = vand.u32 2147483647, %v765
          %v814 = vand.u32 2147483647, %v766
          %v815 = vand.u32 2147483647, %v767
          %v816 = vand.u32 2147483647, %v768
          %v817 = vand.u32 2147483647, %v769
          %v818 = vand.u32 2147483647, %v770
          %v819 = vmul.f32 %v803, 0.3275911
          %v820 = vmul.f32 %v804, 0.3275911
          %v821 = vmul.f32 %v805, 0.3275911
          %v822 = vmul.f32 %v806, 0.3275911
          %v823 = vmul.f32 %v807, 0.3275911
          %v824 = vmul.f32 %v808, 0.3275911
          %v825 = vmul.f32 %v809, 0.3275911
          %v826 = vmul.f32 %v810, 0.3275911
          %v827 = vmul.f32 %v811, 0.3275911
          %v828 = vmul.f32 %v812, 0.3275911
          %v829 = vmul.f32 %v813, 0.3275911
          %v830 = vmul.f32 %v814, 0.3275911
          %v831 = vmul.f32 %v815, 0.3275911
          %v832 = vmul.f32 %v816, 0.3275911
          %v833 = vmul.f32 %v817, 0.3275911
          %v834 = vmul.f32 %v818, 0.3275911
          %v835 = vadd.f32 %v819, 1.0
          %v836 = vadd.f32 %v820, 1.0
          %v837 = vadd.f32 %v821, 1.0
          %v838 = vadd.f32 %v822, 1.0
          %v839 = vadd.f32 %v823, 1.0
          %v840 = vadd.f32 %v824, 1.0
          %v841 = vadd.f32 %v825, 1.0
          %v842 = vadd.f32 %v826, 1.0
          %v843 = vadd.f32 %v827, 1.0
          %v844 = vadd.f32 %v828, 1.0
          %v845 = vadd.f32 %v829, 1.0
          %v846 = vadd.f32 %v830, 1.0
          %v847 = vadd.f32 %v831, 1.0
          %v848 = vadd.f32 %v832, 1.0
          %v849 = vadd.f32 %v833, 1.0
          %v850 = vadd.f32 %v834, 1.0
          %v851 = vrcp.pop %v835
          %v852 = vrcp.pop %v836
          %v853 = vrcp.pop %v837
          %v854 = vrcp.pop %v838
          %v855 = vrcp.pop %v839
          %v856 = vrcp.pop %v840
          %v857 = vrcp.pop %v841
          %v858 = vrcp.pop %v842
          %v859 = vrcp.pop %v843
          %v860 = vrcp.pop %v844
          %v861 = vrcp.pop %v845
          %v862 = vrcp.pop %v846
          %v863 = vrcp.pop %v847
          %v864 = vrcp.pop %v848
          %v865 = vrcp.pop %v849
          %v866 = vrcp.pop %v850
          %v867 = vmul.f32 %v851, 1.0614054
          %v868 = vmul.f32 %v852, 1.0614054
          %v869 = vmul.f32 %v853, 1.0614054
          %v870 = vmul.f32 %v854, 1.0614054
          %v871 = vmul.f32 %v855, 1.0614054
          %v872 = vmul.f32 %v856, 1.0614054
          %v873 = vmul.f32 %v857, 1.0614054
          %v874 = vmul.f32 %v858, 1.0614054
          %v875 = vmul.f32 %v859, 1.0614054
          %v876 = vmul.f32 %v860, 1.0614054
          %v877 = vmul.f32 %v861, 1.0614054
          %v878 = vmul.f32 %v862, 1.0614054
          %v879 = vmul.f32 %v863, 1.0614054
          %v880 = vmul.f32 %v864, 1.0614054
          %v881 = vmul.f32 %v865, 1.0614054
          %v882 = vmul.f32 %v866, 1.0614054
          %v883 = vadd.f32 %v867, -1.4531521
          %v884 = vadd.f32 %v868, -1.4531521
          %v885 = vadd.f32 %v869, -1.4531521
          %v886 = vadd.f32 %v870, -1.4531521
          %v887 = vadd.f32 %v871, -1.4531521
          %v888 = vadd.f32 %v872, -1.4531521
          %v889 = vadd.f32 %v873, -1.4531521
          %v890 = vadd.f32 %v874, -1.4531521
          %v891 = vadd.f32 %v875, -1.4531521
          %v892 = vadd.f32 %v876, -1.4531521
          %v893 = vadd.f32 %v877, -1.4531521
          %v894 = vadd.f32 %v878, -1.4531521
          %v895 = vadd.f32 %v879, -1.4531521
          %v896 = vadd.f32 %v880, -1.4531521
          %v897 = vadd.f32 %v881, -1.4531521
          %v898 = vadd.f32 %v882, -1.4531521
          %v899 = vmul.f32 %v883, %v851
          %v900 = vmul.f32 %v884, %v852
          %v901 = vmul.f32 %v885, %v853
          %v902 = vmul.f32 %v886, %v854
          %v903 = vmul.f32 %v887, %v855
          %v904 = vmul.f32 %v888, %v856
          %v905 = vmul.f32 %v889, %v857
          %v906 = vmul.f32 %v890, %v858
          %v907 = vmul.f32 %v891, %v859
          %v908 = vmul.f32 %v892, %v860
          %v909 = vmul.f32 %v893, %v861
          %v910 = vmul.f32 %v894, %v862
          %v911 = vmul.f32 %v895, %v863
          %v912 = vmul.f32 %v896, %v864
          %v913 = vmul.f32 %v897, %v865
          %v914 = vmul.f32 %v898, %v866
          %v915 = vadd.f32 %v899, 1.4214138
          %v916 = vadd.f32 %v900, 1.4214138
          %v917 = vadd.f32 %v901, 1.4214138
          %v918 = vadd.f32 %v902, 1.4214138
          %v919 = vadd.f32 %v903, 1.4214138
          %v920 = vadd.f32 %v904, 1.4214138
          %v921 = vadd.f32 %v905, 1.4214138
          %v922 = vadd.f32 %v906, 1.4214138
          %v923 = vadd.f32 %v907, 1.4214138
          %v924 = vadd.f32 %v908, 1.4214138
          %v925 = vadd.f32 %v909, 1.4214138
          %v926 = vadd.f32 %v910, 1.4214138
          %v927 = vadd.f32 %v911, 1.4214138
          %v928 = vadd.f32 %v912, 1.4214138
          %v929 = vadd.f32 %v913, 1.4214138
          %v930 = vadd.f32 %v914, 1.4214138
          %v931 = vmul.f32 %v915, %v851
          %v932 = vmul.f32 %v916, %v852
          %v933 = vmul.f32 %v917, %v853
          %v934 = vmul.f32 %v918, %v854
          %v935 = vmul.f32 %v919, %v855
          %v936 = vmul.f32 %v920, %v856
          %v937 = vmul.f32 %v921, %v857
          %v938 = vmul.f32 %v922, %v858
          %v939 = vmul.f32 %v923, %v859
          %v940 = vmul.f32 %v924, %v860
          %v941 = vmul.f32 %v925, %v861
          %v942 = vmul.f32 %v926, %v862
          %v943 = vmul.f32 %v927, %v863
          %v944 = vmul.f32 %v928, %v864
          %v945 = vmul.f32 %v929, %v865
          %v946 = vmul.f32 %v930, %v866
          %v947 = vadd.f32 %v931, -0.28449672
          %v948 = vadd.f32 %v932, -0.28449672
          %v949 = vadd.f32 %v933, -0.28449672
          %v950 = vadd.f32 %v934, -0.28449672
          %v951 = vadd.f32 %v935, -0.28449672
          %v952 = vadd.f32 %v936, -0.28449672
          %v953 = vadd.f32 %v937, -0.28449672
          %v954 = vadd.f32 %v938, -0.28449672
          %v955 = vadd.f32 %v939, -0.28449672
          %v956 = vadd.f32 %v940, -0.28449672
          %v957 = vadd.f32 %v941, -0.28449672
          %v958 = vadd.f32 %v942, -0.28449672
          %v959 = vadd.f32 %v943, -0.28449672
          %v960 = vadd.f32 %v944, -0.28449672
          %v961 = vadd.f32 %v945, -0.28449672
          %v962 = vadd.f32 %v946, -0.28449672
          %v963 = vmul.f32 %v947, %v851
          %v964 = vmul.f32 %v948, %v852
          %v965 = vmul.f32 %v949, %v853
          %v966 = vmul.f32 %v950, %v854
          %v967 = vmul.f32 %v951, %v855
          %v968 = vmul.f32 %v952, %v856
          %v969 = vmul.f32 %v953, %v857
          %v970 = vmul.f32 %v954, %v858
          %v971 = vmul.f32 %v955, %v859
          %v972 = vmul.f32 %v956, %v860
          %v973 = vmul.f32 %v957, %v861
          %v974 = vmul.f32 %v958, %v862
          %v975 = vmul.f32 %v959, %v863
          %v976 = vmul.f32 %v960, %v864
          %v977 = vmul.f32 %v961, %v865
          %v978 = vmul.f32 %v962, %v866
          %v979 = vadd.f32 %v963, 0.2548296
          %v980 = vadd.f32 %v964, 0.2548296
          %v981 = vadd.f32 %v965, 0.2548296
          %v982 = vadd.f32 %v966, 0.2548296
          %v983 = vadd.f32 %v967, 0.2548296
          %v984 = vadd.f32 %v968, 0.2548296
          %v985 = vadd.f32 %v969, 0.2548296
          %v986 = vadd.f32 %v970, 0.2548296
          %v987 = vadd.f32 %v971, 0.2548296
          %v988 = vadd.f32 %v972, 0.2548296
          %v989 = vadd.f32 %v973, 0.2548296
          %v990 = vadd.f32 %v974, 0.2548296
          %v991 = vadd.f32 %v975, 0.2548296
          %v992 = vadd.f32 %v976, 0.2548296
          %v993 = vadd.f32 %v977, 0.2548296
          %v994 = vadd.f32 %v978, 0.2548296
          %v995 = vmul.f32 %v979, %v851
          %v996 = vmul.f32 %v980, %v852
          %v997 = vmul.f32 %v981, %v853
          %v998 = vmul.f32 %v982, %v854
          %v999 = vmul.f32 %v983, %v855
          %v1000 = vmul.f32 %v984, %v856
          %v1001 = vmul.f32 %v985, %v857
          %v1002 = vmul.f32 %v986, %v858
          %v1003 = vmul.f32 %v987, %v859
          %v1004 = vmul.f32 %v988, %v860
          %v1005 = vmul.f32 %v989, %v861
          %v1006 = vmul.f32 %v990, %v862
          %v1007 = vmul.f32 %v991, %v863
          %v1008 = vmul.f32 %v992, %v864
          %v1009 = vmul.f32 %v993, %v865
          %v1010 = vmul.f32 %v994, %v866
          %v1011 = vsub.f32 0.0, %v803
          %v1012 = vsub.f32 0.0, %v804
          %v1013 = vsub.f32 0.0, %v805
          %v1014 = vsub.f32 0.0, %v806
          %v1015 = vsub.f32 0.0, %v807
          %v1016 = vsub.f32 0.0, %v808
          %v1017 = vsub.f32 0.0, %v809
          %v1018 = vsub.f32 0.0, %v810
          %v1019 = vsub.f32 0.0, %v811
          %v1020 = vsub.f32 0.0, %v812
          %v1021 = vsub.f32 0.0, %v813
          %v1022 = vsub.f32 0.0, %v814
          %v1023 = vsub.f32 0.0, %v815
          %v1024 = vsub.f32 0.0, %v816
          %v1025 = vsub.f32 0.0, %v817
          %v1026 = vsub.f32 0.0, %v818
          %v1027 = vmul.f32 %v1011, %v803
          %v1028 = vmul.f32 %v1012, %v804
          %v1029 = vmul.f32 %v1013, %v805
          %v1030 = vmul.f32 %v1014, %v806
          %v1031 = vmul.f32 %v1015, %v807
          %v1032 = vmul.f32 %v1016, %v808
          %v1033 = vmul.f32 %v1017, %v809
          %v1034 = vmul.f32 %v1018, %v810
          %v1035 = vmul.f32 %v1019, %v811
          %v1036 = vmul.f32 %v1020, %v812
          %v1037 = vmul.f32 %v1021, %v813
          %v1038 = vmul.f32 %v1022, %v814
          %v1039 = vmul.f32 %v1023, %v815
          %v1040 = vmul.f32 %v1024, %v816
          %v1041 = vmul.f32 %v1025, %v817
          %v1042 = vmul.f32 %v1026, %v818
          %v1043 = vmul.f32 %v1027, 1.442695
          %v1044 = vpow.pop %v1043
          %v1045 = vmul.f32 %v1028, 1.442695
          %v1046 = vpow.pop %v1045
          %v1047 = vmul.f32 %v1029, 1.442695
          %v1048 = vpow.pop %v1047
          %v1049 = vmul.f32 %v1030, 1.442695
          %v1050 = vpow.pop %v1049
          %v1051 = vmul.f32 %v1031, 1.442695
          %v1052 = vpow.pop %v1051
          %v1053 = vmul.f32 %v1032, 1.442695
          %v1054 = vpow.pop %v1053
          %v1055 = vmul.f32 %v1033, 1.442695
          %v1056 = vpow.pop %v1055
          %v1057 = vmul.f32 %v1034, 1.442695
          %v1058 = vpow.pop %v1057
          %v1059 = vmul.f32 %v1035, 1.442695
          %v1060 = vpow.pop %v1059
          %v1061 = vmul.f32 %v1036, 1.442695
          %v1062 = vpow.pop %v1061
          %v1063 = vmul.f32 %v1037, 1.442695
          %v1064 = vpow.pop %v1063
          %v1065 = vmul.f32 %v1038, 1.442695
          %v1066 = vpow.pop %v1065
          %v1067 = vmul.f32 %v1039, 1.442695
          %v1068 = vpow.pop %v1067
          %v1069 = vmul.f32 %v1040, 1.442695
          %v1070 = vpow.pop %v1069
          %v1071 = vmul.f32 %v1041, 1.442695
          %v1072 = vpow.pop %v1071
          %v1073 = vmul.f32 %v1042, 1.442695
          %v1074 = vpow.pop %v1073
          %v1075 = vmul.f32 %v995, %v1044
          %v1076 = vmul.f32 %v996, %v1046
          %v1077 = vmul.f32 %v997, %v1048
          %v1078 = vmul.f32 %v998, %v1050
          %v1079 = vmul.f32 %v999, %v1052
          %v1080 = vmul.f32 %v1000, %v1054
          %v1081 = vmul.f32 %v1001, %v1056
          %v1082 = vmul.f32 %v1002, %v1058
          %v1083 = vmul.f32 %v1003, %v1060
          %v1084 = vmul.f32 %v1004, %v1062
          %v1085 = vmul.f32 %v1005, %v1064
          %v1086 = vmul.f32 %v1006, %v1066
          %v1087 = vmul.f32 %v1007, %v1068
          %v1088 = vmul.f32 %v1008, %v1070
          %v1089 = vmul.f32 %v1009, %v1072
          %v1090 = vmul.f32 %v1010, %v1074
          %v1091 = vsub.f32 1.0, %v1075
          %v1092 = vsub.f32 1.0, %v1076
          %v1093 = vsub.f32 1.0, %v1077
          %v1094 = vsub.f32 1.0, %v1078
          %v1095 = vsub.f32 1.0, %v1079
          %v1096 = vsub.f32 1.0, %v1080
          %v1097 = vsub.f32 1.0, %v1081
          %v1098 = vsub.f32 1.0, %v1082
          %v1099 = vsub.f32 1.0, %v1083
          %v1100 = vsub.f32 1.0, %v1084
          %v1101 = vsub.f32 1.0, %v1085
          %v1102 = vsub.f32 1.0, %v1086
          %v1103 = vsub.f32 1.0, %v1087
          %v1104 = vsub.f32 1.0, %v1088
          %v1105 = vsub.f32 1.0, %v1089
          %v1106 = vsub.f32 1.0, %v1090
          %v1107 = vmul.f32 %v787, %v1091
          %v1108 = vmul.f32 %v788, %v1092
          %v1109 = vmul.f32 %v789, %v1093
          %v1110 = vmul.f32 %v790, %v1094
          %v1111 = vmul.f32 %v791, %v1095
          %v1112 = vmul.f32 %v792, %v1096
          %v1113 = vmul.f32 %v793, %v1097
          %v1114 = vmul.f32 %v794, %v1098
          %v1115 = vmul.f32 %v795, %v1099
          %v1116 = vmul.f32 %v796, %v1100
          %v1117 = vmul.f32 %v797, %v1101
          %v1118 = vmul.f32 %v798, %v1102
          %v1119 = vmul.f32 %v799, %v1103
          %v1120 = vmul.f32 %v800, %v1104
          %v1121 = vmul.f32 %v801, %v1105
          %v1122 = vmul.f32 %v802, %v1106
          %v1123 = vadd.f32 %v1107, 1.0
          %v1124 = vadd.f32 %v1108, 1.0
          %v1125 = vadd.f32 %v1109, 1.0
          %v1126 = vadd.f32 %v1110, 1.0
          %v1127 = vadd.f32 %v1111, 1.0
          %v1128 = vadd.f32 %v1112, 1.0
          %v1129 = vadd.f32 %v1113, 1.0
          %v1130 = vadd.f32 %v1114, 1.0
          %v1131 = vadd.f32 %v1115, 1.0
          %v1132 = vadd.f32 %v1116, 1.0
          %v1133 = vadd.f32 %v1117, 1.0
          %v1134 = vadd.f32 %v1118, 1.0
          %v1135 = vadd.f32 %v1119, 1.0
          %v1136 = vadd.f32 %v1120, 1.0
          %v1137 = vadd.f32 %v1121, 1.0
          %v1138 = vadd.f32 %v1122, 1.0
          %v1139 = vmul.f32 %v739, %v1123
          %v1140 = vmul.f32 %v740, %v1124
          %v1141 = vmul.f32 %v741, %v1125
          %v1142 = vmul.f32 %v742, %v1126
          %v1143 = vmul.f32 %v743, %v1127
          %v1144 = vmul.f32 %v744, %v1128
          %v1145 = vmul.f32 %v745, %v1129
          %v1146 = vmul.f32 %v746, %v1130
          %v1147 = vmul.f32 %v747, %v1131
          %v1148 = vmul.f32 %v748, %v1132
          %v1149 = vmul.f32 %v749, %v1133
          %v1150 = vmul.f32 %v750, %v1134
          %v1151 = vmul.f32 %v751, %v1135
          %v1152 = vmul.f32 %v752, %v1136
          %v1153 = vmul.f32 %v753, %v1137
          %v1154 = vmul.f32 %v754, %v1138
          %v1155 = vpack.c.bf16 %v1140, %v1139
          %v1156 = vpack.c.bf16 %v1142, %v1141
          %v1157 = vpack.c.bf16 %v1144, %v1143
          %v1158 = vpack.c.bf16 %v1146, %v1145
          %v1159 = vpack.c.bf16 %v1148, %v1147
          %v1160 = vpack.c.bf16 %v1150, %v1149
          %v1161 = vpack.c.bf16 %v1152, %v1151
          %v1162 = vpack.c.bf16 %v1154, %v1153
          %v1163 = vld [vmem:[#allocation2] sm:$0xff]
          %v1164 = vld [vmem:[#allocation2 + $0x8] sm:$0xff]
          %v1165 = vld [vmem:[#allocation2 + $0x10] sm:$0xff]
          %v1166 = vld [vmem:[#allocation2 + $0x18] sm:$0xff]
          %v1167 = vld [vmem:[#allocation2 + $0x20] sm:$0xff]
          %v1168 = vld [vmem:[#allocation2 + $0x28] sm:$0xff]
          %v1169 = vld [vmem:[#allocation2 + $0x30] sm:$0xff]
          %v1170 = vld [vmem:[#allocation2 + $0x38] sm:$0xff]
          %v1171 = vld [vmem:[#allocation2 + $0x40] sm:$0xff]
          %v1172 = vld [vmem:[#allocation2 + $0x48] sm:$0xff]
          %v1173 = vld [vmem:[#allocation2 + $0x50] sm:$0xff]
          %v1174 = vld [vmem:[#allocation2 + $0x58] sm:$0xff]
          %v1175 = vld [vmem:[#allocation2 + $0x60] sm:$0xff]
          %v1176 = vld [vmem:[#allocation2 + $0x68] sm:$0xff]
          %v1177 = vld [vmem:[#allocation2 + $0x70] sm:$0xff]
          %v1178 = vld [vmem:[#allocation2 + $0x78] sm:$0xff]
          %v1179 = vld [vmem:[%s465] sm:$0xf]
          %v1180 = vld [vmem:[%s465 + $0x4] sm:$0xf]
          %v1181 = vld [vmem:[%s465 + $0x8] sm:$0xf]
          %v1182 = vld [vmem:[%s465 + $0xc] sm:$0xf]
          %v1183 = vld [vmem:[%s465 + $0x10] sm:$0xf]
          %v1184 = vld [vmem:[%s465 + $0x14] sm:$0xf]
          %v1185 = vld [vmem:[%s465 + $0x18] sm:$0xf]
          %v1186 = vld [vmem:[%s465 + $0x1c] sm:$0xf]
          %v1187 = vld [vmem:[%s465 + $0x20] sm:$0xf]
          %v1188 = vld [vmem:[%s465 + $0x24] sm:$0xf]
          %v1189 = vld [vmem:[%s465 + $0x28] sm:$0xf]
          %v1190 = vld [vmem:[%s465 + $0x2c] sm:$0xf]
          %v1191 = vld [vmem:[%s465 + $0x30] sm:$0xf]
          %v1192 = vld [vmem:[%s465 + $0x34] sm:$0xf]
          %v1193 = vld [vmem:[%s465 + $0x38] sm:$0xf]
          %v1194 = vld [vmem:[%s465 + $0x3c] sm:$0xf]
          %v1211 = vunpack.c.l.b16 %v1179
          %v1212 = vunpack.c.l.b16 %v1180
          %v1213 = vunpack.c.l.b16 %v1181
          %v1214 = vunpack.c.l.b16 %v1182
          %v1215 = vunpack.c.l.b16 %v1183
          %v1216 = vunpack.c.l.b16 %v1184
          %v1217 = vunpack.c.l.b16 %v1185
          %v1218 = vunpack.c.l.b16 %v1186
          %v1219 = vunpack.c.l.b16 %v1187
          %v1220 = vunpack.c.l.b16 %v1188
          %v1221 = vunpack.c.l.b16 %v1189
          %v1222 = vunpack.c.l.b16 %v1190
          %v1223 = vunpack.c.l.b16 %v1191
          %v1224 = vunpack.c.l.b16 %v1192
          %v1225 = vunpack.c.l.b16 %v1193
          %v1226 = vunpack.c.l.b16 %v1194
          %v1227 = vpack.c.b16 %v1212, %v1211
          %v1228 = vpack.c.b16 %v1214, %v1213
          %v1229 = vpack.c.b16 %v1216, %v1215
          %v1230 = vpack.c.b16 %v1218, %v1217
          %v1231 = vpack.c.b16 %v1220, %v1219
          %v1232 = vpack.c.b16 %v1222, %v1221
          %v1233 = vpack.c.b16 %v1224, %v1223
          %v1234 = vpack.c.b16 %v1226, %v1225
          %1243 = vmatprep.subr.bf16.mxu0 0
          %1244 = vmatpush1.bf16.msra.mxu0 %v1234
          %1245 = vmatprep.subr.bf16.mxu0 0
          %1246 = vmatpush1.bf16.msra.mxu0 %v1233
          %1247 = vmatprep.subr.bf16.mxu0 0
          %1248 = vmatpush1.bf16.msra.mxu0 %v1232
          %1249 = vmatprep.subr.bf16.mxu0 0
          %1250 = vmatpush1.bf16.msra.mxu0 %v1231
          %1251 = vmatprep.subr.bf16.mxu0 0
          %1252 = vmatpush1.bf16.msra.mxu0 %v1230
          %1253 = vmatprep.subr.bf16.mxu0 0
          %1254 = vmatpush1.bf16.msra.mxu0 %v1229
          %1255 = vmatprep.subr.bf16.mxu0 0
          %1256 = vmatpush1.bf16.msra.mxu0 %v1228
          %1257 = vmatprep.subr.bf16.mxu0 0
          %1258 = vmatpush1.bf16.msra.mxu0 %v1227
          %1259 = vmatprep.subr.bf16.mxu0 0
          %1260 = vmatpush2.bf16.msra.mxu0 0
          %1261 = vmatprep.subr.bf16.mxu0 0
          %1262 = vmatpush2.bf16.msra.mxu0 0
          %1263 = vmatprep.subr.bf16.mxu0 0
          %1264 = vmatpush2.bf16.msra.mxu0 0
          %1265 = vmatprep.subr.bf16.mxu0 0
          %1266 = vmatpush2.bf16.msra.mxu0 0
          %1267 = vmatprep.subr.bf16.mxu0 0
          %1268 = vmatpush2.bf16.msra.mxu0 0
          %1269 = vmatprep.subr.bf16.mxu0 0
          %1270 = vmatpush2.bf16.msra.mxu0 0
          %1271 = vmatprep.subr.bf16.mxu0 0
          %1272 = vmatpush2.bf16.msra.mxu0 0
          %1273 = vmatprep.subr.bf16.mxu0 0
          %1274 = vmatpush2.bf16.msra.mxu0 0
          %1275 = vmatprep.mubr.bf16.mxu0 0
          %1276 = vmatmul.mubr.bf16.gmra.mxu0 %v1155
          %v1277 = vpop.f32.mrf.mxu0
          %v1278 = vadd.f32 0.0, %v1277
          %v1279 = vpop.f32.mrf.mxu0
          %v1280 = vpop.f32.mrf.mxu0
          %v1281 = vadd.f32 0.0, %v1280
          %v1282 = vpop.f32.mrf.mxu0
          %1283 = vmatprep.mubr.bf16.mxu0 0
          %1284 = vmatmul.mubr.bf16.gmra.mxu0 %v1156
          %v1285 = vpop.f32.mrf.mxu0
          %v1286 = vadd.f32 0.0, %v1285
          %v1287 = vpop.f32.mrf.mxu0
          %v1288 = vpop.f32.mrf.mxu0
          %v1289 = vadd.f32 0.0, %v1288
          %v1290 = vpop.f32.mrf.mxu0
          %1291 = vmatprep.mubr.bf16.mxu0 0
          %1292 = vmatmul.mubr.bf16.gmra.mxu0 %v1157
          %v1293 = vpop.f32.mrf.mxu0
          %v1294 = vadd.f32 0.0, %v1293
          %v1295 = vpop.f32.mrf.mxu0
          %v1296 = vpop.f32.mrf.mxu0
          %v1297 = vadd.f32 0.0, %v1296
          %v1298 = vpop.f32.mrf.mxu0
          %1299 = vmatprep.mubr.bf16.mxu0 0
          %1300 = vmatmul.mubr.bf16.gmra.mxu0 %v1158
          %v1301 = vpop.f32.mrf.mxu0
          %v1302 = vadd.f32 0.0, %v1301
          %v1303 = vpop.f32.mrf.mxu0
          %v1304 = vpop.f32.mrf.mxu0
          %v1305 = vadd.f32 0.0, %v1304
          %v1306 = vpop.f32.mrf.mxu0
          %1307 = vmatprep.mubr.bf16.mxu0 0
          %1308 = vmatmul.mubr.bf16.gmra.mxu0 %v1159
          %v1309 = vpop.f32.mrf.mxu0
          %v1310 = vadd.f32 0.0, %v1309
          %v1311 = vpop.f32.mrf.mxu0
          %v1312 = vpop.f32.mrf.mxu0
          %v1313 = vadd.f32 0.0, %v1312
          %v1314 = vpop.f32.mrf.mxu0
          %1315 = vmatprep.mubr.bf16.mxu0 0
          %1316 = vmatmul.mubr.bf16.gmra.mxu0 %v1160
          %v1317 = vpop.f32.mrf.mxu0
          %v1318 = vadd.f32 0.0, %v1317
          %v1319 = vpop.f32.mrf.mxu0
          %v1320 = vpop.f32.mrf.mxu0
          %v1321 = vadd.f32 0.0, %v1320
          %v1322 = vpop.f32.mrf.mxu0
          %1323 = vmatprep.mubr.bf16.mxu0 0
          %1324 = vmatmul.mubr.bf16.gmra.mxu0 %v1161
          %v1325 = vpop.f32.mrf.mxu0
          %v1326 = vadd.f32 0.0, %v1325
          %v1327 = vpop.f32.mrf.mxu0
          %v1328 = vpop.f32.mrf.mxu0
          %v1329 = vadd.f32 0.0, %v1328
          %v1330 = vpop.f32.mrf.mxu0
          %1331 = vmatprep.mubr.bf16.mxu0 0
          %1332 = vmatmul.mubr.bf16.gmra.mxu0 %v1162
          %v1333 = vpop.f32.mrf.mxu0
          %v1334 = vadd.f32 0.0, %v1333
          %v1335 = vpop.f32.mrf.mxu0
          %v1336 = vpop.f32.mrf.mxu0
          %v1337 = vadd.f32 0.0, %v1336
          %v1338 = vpop.f32.mrf.mxu0
          %1339 = vdwg.mxu0
          %v1340 = vadd.f32 %v1163, %v1278
          %v1341 = vadd.f32 %v1164, %v1281
          %v1342 = vadd.f32 %v1165, %v1286
          %v1343 = vadd.f32 %v1166, %v1289
          %v1344 = vadd.f32 %v1167, %v1294
          %v1345 = vadd.f32 %v1168, %v1297
          %v1346 = vadd.f32 %v1169, %v1302
          %v1347 = vadd.f32 %v1170, %v1305
          %v1348 = vadd.f32 %v1171, %v1310
          %v1349 = vadd.f32 %v1172, %v1313
          %v1350 = vadd.f32 %v1173, %v1318
          %v1351 = vadd.f32 %v1174, %v1321
          %v1352 = vadd.f32 %v1175, %v1326
          %v1353 = vadd.f32 %v1176, %v1329
          %v1354 = vadd.f32 %v1177, %v1334
          %v1355 = vadd.f32 %v1178, %v1337
          %1356 = vst [vmem:[#allocation2] sm:$0xff] %v1340
          %1357 = vst [vmem:[#allocation2 + $0x8] sm:$0xff] %v1341
          %1358 = vst [vmem:[#allocation2 + $0x10] sm:$0xff] %v1342
          %1359 = vst [vmem:[#allocation2 + $0x18] sm:$0xff] %v1343
          %1360 = vst [vmem:[#allocation2 + $0x20] sm:$0xff] %v1344
          %1361 = vst [vmem:[#allocation2 + $0x28] sm:$0xff] %v1345
          %1362 = vst [vmem:[#allocation2 + $0x30] sm:$0xff] %v1346
          %1363 = vst [vmem:[#allocation2 + $0x38] sm:$0xff] %v1347
          %1364 = vst [vmem:[#allocation2 + $0x40] sm:$0xff] %v1348
          %1365 = vst [vmem:[#allocation2 + $0x48] sm:$0xff] %v1349
          %1366 = vst [vmem:[#allocation2 + $0x50] sm:$0xff] %v1350
          %1367 = vst [vmem:[#allocation2 + $0x58] sm:$0xff] %v1351
          %1368 = vst [vmem:[#allocation2 + $0x60] sm:$0xff] %v1352
          %1369 = vst [vmem:[#allocation2 + $0x68] sm:$0xff] %v1353
          %1370 = vst [vmem:[#allocation2 + $0x70] sm:$0xff] %v1354
          %1371 = vst [vmem:[#allocation2 + $0x78] sm:$0xff] %v1355
        $region89: #{pmoe_forward.1} parent=76 // pred_fallthru
          _
        %p1372 = pnand %p482, %p481
        %p1373 = pneg %p1372
        // Predicated region
        $region90: #{pmoe_forward.1} parent=76 // pred_check
          _
        $region91: #{pmoe_forward.1} parent=76 // pred_check_branch
          %1375 = sbr.rel (%p1372) target = $region93
        $region92: #{pmoe_forward.1} parent=76 // pred_region
          %v1376 = vld [vmem:[#allocation2] sm:$0xff]
          %v1377 = vld [vmem:[#allocation2 + $0x8] sm:$0xff]
          %v1378 = vld [vmem:[#allocation2 + $0x10] sm:$0xff]
          %v1379 = vld [vmem:[#allocation2 + $0x18] sm:$0xff]
          %v1380 = vld [vmem:[#allocation2 + $0x20] sm:$0xff]
          %v1381 = vld [vmem:[#allocation2 + $0x28] sm:$0xff]
          %v1382 = vld [vmem:[#allocation2 + $0x30] sm:$0xff]
          %v1383 = vld [vmem:[#allocation2 + $0x38] sm:$0xff]
          %v1384 = vld [vmem:[#allocation2 + $0x40] sm:$0xff]
          %v1385 = vld [vmem:[#allocation2 + $0x48] sm:$0xff]
          %v1386 = vld [vmem:[#allocation2 + $0x50] sm:$0xff]
          %v1387 = vld [vmem:[#allocation2 + $0x58] sm:$0xff]
          %v1388 = vld [vmem:[#allocation2 + $0x60] sm:$0xff]
          %v1389 = vld [vmem:[#allocation2 + $0x68] sm:$0xff]
          %v1390 = vld [vmem:[#allocation2 + $0x70] sm:$0xff]
          %v1391 = vld [vmem:[#allocation2 + $0x78] sm:$0xff]
          %v1392 = vld [vmem:[%s471] sm:$0x1]
          %v1394 = vlaneseq
          %v1395 = vshrl.u32 %v1394, 7
          %v1396 = vsub.s32 0, %v1395
          %v1397 = vrot.slane %v1392, %v1396
          %v1399 = vadd.f32 %v1376, %v1397
          %v1400 = vadd.f32 %v1377, %v1397
          %v1401 = vadd.f32 %v1378, %v1397
          %v1402 = vadd.f32 %v1379, %v1397
          %v1403 = vadd.f32 %v1380, %v1397
          %v1404 = vadd.f32 %v1381, %v1397
          %v1405 = vadd.f32 %v1382, %v1397
          %v1406 = vadd.f32 %v1383, %v1397
          %v1407 = vadd.f32 %v1384, %v1397
          %v1408 = vadd.f32 %v1385, %v1397
          %v1409 = vadd.f32 %v1386, %v1397
          %v1410 = vadd.f32 %v1387, %v1397
          %v1411 = vadd.f32 %v1388, %v1397
          %v1412 = vadd.f32 %v1389, %v1397
          %v1413 = vadd.f32 %v1390, %v1397
          %v1414 = vadd.f32 %v1391, %v1397
          %v1415 = vpack.c.bf16 %v1400, %v1399
          %v1416 = vpack.c.bf16 %v1402, %v1401
          %v1417 = vpack.c.bf16 %v1404, %v1403
          %v1418 = vpack.c.bf16 %v1406, %v1405
          %v1419 = vpack.c.bf16 %v1408, %v1407
          %v1420 = vpack.c.bf16 %v1410, %v1409
          %v1421 = vpack.c.bf16 %v1412, %v1411
          %v1422 = vpack.c.bf16 %v1414, %v1413
          %v1431 = vunpack.c.l.b16 %v1415
          %v1432 = vunpack.c.h.b16 %v1415
          %v1433 = vunpack.c.l.b16 %v1416
          %v1434 = vunpack.c.h.b16 %v1416
          %v1435 = vunpack.c.l.b16 %v1417
          %v1436 = vunpack.c.h.b16 %v1417
          %v1437 = vunpack.c.l.b16 %v1418
          %v1438 = vunpack.c.h.b16 %v1418
          %v1439 = vunpack.c.l.b16 %v1419
          %v1440 = vunpack.c.h.b16 %v1419
          %v1441 = vunpack.c.l.b16 %v1420
          %v1442 = vunpack.c.h.b16 %v1420
          %v1443 = vunpack.c.l.b16 %v1421
          %v1444 = vunpack.c.h.b16 %v1421
          %v1445 = vunpack.c.l.b16 %v1422
          %v1446 = vunpack.c.h.b16 %v1422
          %v1447 = vpack.c.b16 %v1431, %v1431
          %v1448 = vpack.c.b16 %v1432, %v1432
          %v1449 = vpack.c.b16 %v1433, %v1433
          %v1450 = vpack.c.b16 %v1434, %v1434
          %v1451 = vpack.c.b16 %v1435, %v1435
          %v1452 = vpack.c.b16 %v1436, %v1436
          %v1453 = vpack.c.b16 %v1437, %v1437
          %v1454 = vpack.c.b16 %v1438, %v1438
          %v1455 = vpack.c.b16 %v1439, %v1439
          %v1456 = vpack.c.b16 %v1440, %v1440
          %v1457 = vpack.c.b16 %v1441, %v1441
          %v1458 = vpack.c.b16 %v1442, %v1442
          %v1459 = vpack.c.b16 %v1443, %v1443
          %v1460 = vpack.c.b16 %v1444, %v1444
          %v1461 = vpack.c.b16 %v1445, %v1445
          %v1462 = vpack.c.b16 %v1446, %v1446
          %1479 = vst [vmem:[%s477] sm:$0xf] %v1447
          %1480 = vst [vmem:[%s477 + $0x4] sm:$0xf] %v1448
          %1481 = vst [vmem:[%s477 + $0x8] sm:$0xf] %v1449
          %1482 = vst [vmem:[%s477 + $0xc] sm:$0xf] %v1450
          %1483 = vst [vmem:[%s477 + $0x10] sm:$0xf] %v1451
          %1484 = vst [vmem:[%s477 + $0x14] sm:$0xf] %v1452
          %1485 = vst [vmem:[%s477 + $0x18] sm:$0xf] %v1453
          %1486 = vst [vmem:[%s477 + $0x1c] sm:$0xf] %v1454
          %1487 = vst [vmem:[%s477 + $0x20] sm:$0xf] %v1455
          %1488 = vst [vmem:[%s477 + $0x24] sm:$0xf] %v1456
          %1489 = vst [vmem:[%s477 + $0x28] sm:$0xf] %v1457
          %1490 = vst [vmem:[%s477 + $0x2c] sm:$0xf] %v1458
          %1491 = vst [vmem:[%s477 + $0x30] sm:$0xf] %v1459
          %1492 = vst [vmem:[%s477 + $0x34] sm:$0xf] %v1460
          %1493 = vst [vmem:[%s477 + $0x38] sm:$0xf] %v1461
          %1494 = vst [vmem:[%s477 + $0x3c] sm:$0xf] %v1462
        $region93: #{pmoe_forward.1} parent=76 // pred_fallthru
          _
        %p1495 = scmp.ge.s32.totalorder %s29, %s480
        %p1496 = pnand %p482, %p1495
        %p1497 = pneg %p1496
        // Predicated region
        $region94: #{pmoe_forward.1} parent=76 // pred_check
          _
        $region95: #{pmoe_forward.1} parent=76 // pred_check_branch
          %1499 = sbr.rel (%p1496) target = $region97
        $region96: #{pmoe_forward.1} parent=76 // pred_region
          %1500 = vst [vmem:[%s477] sm:$0xf] 0
          %1501 = vst [vmem:[%s477 + $0x4] sm:$0xf] 0
          %1502 = vst [vmem:[%s477 + $0x8] sm:$0xf] 0
          %1503 = vst [vmem:[%s477 + $0xc] sm:$0xf] 0
          %1504 = vst [vmem:[%s477 + $0x10] sm:$0xf] 0
          %1505 = vst [vmem:[%s477 + $0x14] sm:$0xf] 0
          %1506 = vst [vmem:[%s477 + $0x18] sm:$0xf] 0
          %1507 = vst [vmem:[%s477 + $0x1c] sm:$0xf] 0
          %1508 = vst [vmem:[%s477 + $0x20] sm:$0xf] 0
          %1509 = vst [vmem:[%s477 + $0x24] sm:$0xf] 0
          %1510 = vst [vmem:[%s477 + $0x28] sm:$0xf] 0
          %1511 = vst [vmem:[%s477 + $0x2c] sm:$0xf] 0
          %1512 = vst [vmem:[%s477 + $0x30] sm:$0xf] 0
          %1513 = vst [vmem:[%s477 + $0x34] sm:$0xf] 0
          %1514 = vst [vmem:[%s477 + $0x38] sm:$0xf] 0
          %1515 = vst [vmem:[%s477 + $0x3c] sm:$0xf] 0
        $region97: #{pmoe_forward.1} parent=76 // pred_fallthru
          _
        %s1516 = smul.u32 16, %s29
        %p1517 = scmp.lt.s32.totalorder %s1516, 127
        %s1518 = scalar_select %p1517, %s1516, 127
        %s1519 = smul.addr %s1518, 4
        %s1520 = scalar_lea.vmem %s7, %s1519
        // Predicated region
        $region98: #{pmoe_forward.1} parent=76 // pred_check
          %p1521 = pneg %p199
        $region99: #{pmoe_forward.1} parent=76 // pred_check_branch
          %1523 = sbr.rel (%p1521) target = $region101
        $region100: #{pmoe_forward.1} parent=76 // pred_region
          %s1524 = smul.u32 16, %s29
        $region101: #{pmoe_forward.1} parent=76 // pred_fallthru
          _
      $region77: #{pmoe_forward.1} parent=5 // pred_fallthru
        _
      %p1525 = scmp.le.s32.totalorder 2, %s20
      // Predicated region
      $region102: #{pmoe_forward.1} parent=5 // pred_check
        %p1526 = pneg %p1525
      $region103: #{pmoe_forward.1} parent=5 // pred_check_branch
        %1528 = sbr.rel (%p1526) target = $region105
      $region104: #{pmoe_forward.1} parent=5 // pred_region
        %s1529 = ssub.s32 %s20, 2
        // Predicated region
        $region106: #{pmoe_forward.1} parent=104 // pred_check
          %p1530 = pneg %p205
        $region107: #{pmoe_forward.1} parent=104 // pred_check_branch
          %1532 = sbr.rel (%p1530) target = $region109
        $region108: #{pmoe_forward.1} parent=104 // pred_region
          %s1533 = smul.u32 16, %s31
          %p1534 = scmp.lt.s32.totalorder %s1533, 127
          %s1535 = scalar_select %p1534, %s1533, 127
          %s1536 = smul.addr %s1535, 4
          %s1537 = scalar_lea.vmem %s7, %s1536
        $region109: #{pmoe_forward.1} parent=104 // pred_fallthru
          _
      $region105: #{pmoe_forward.1} parent=5 // pred_fallthru
        _
    $region6: #{pmoe_forward.1} parent=1 // loop_footer
      %s24 = sadd.s32 1, %s20
    $region7: #{pmoe_forward.1} parent=1 // loop_footer_branch
      %19 = sbr.rel target = $region3
    $region8: #{pmoe_forward.1} parent=1 // loop_exit
      _

</llo_original>
